<compile_context>
chip_gen: v5e
topology: v5e:2x2
jax: 0.10.0
libtpu: 0.0.40
codegen_flags: <defaults>
</compile_context>

<pallas_src>
import numpy as np
import jax
import jax.numpy as jnp
from jax import lax
from jax.experimental import pallas as pl
from jax.experimental.pallas import tpu as pltpu  # noqa: F401  (kept for TPU-specific params if needed)

# ---------------- problem sizes (small, consistent with the module) --------
T = 8          # sequence length
B = 2          # batch size
E = 16         # embedding_dim
H = 32         # hidden_dim
H2 = H // 2    # per-direction LSTM hidden size
V = 50         # dict_size

HI = jax.lax.Precision.HIGHEST

# ---- packed weight-slab row offsets (all 8-row aligned, 128 lanes wide) ----
_OFF_XPROJ = 0                      # (128,128)  rows 0:2E hold the x-projection weight
_OFF_WHH = 128                      # (32,128)   block-diag recurrent weight
_OFF_BIAS = 160                     # (8,128)    row 160 = packed bias (b_ih + b_hh)
_OFF_WIN = 168                      # (64,128)   block-diag attention linear_in (both heads)
_OFF_WOUT = 232                     # (128,128)  block-diag attention linear_out (both heads)
_SLAB_ROWS = 360


# ---------------------------------------------------------------------------
# Fused kernel.
#   wslab_ref (360,128) : all weights, lane-dense, static row offsets
#   xslab_ref (32,128)  : rows 0:16 left sentence, 16:32 right; each row
#                         t*B+b holds [x(t,b) | x(T-1-t,b)] in cols 0:32
#   out_ref   (8,128)   : rows 0:B -> [hl_last(32) | hr_last(32) | sim(1) | 0...]
# ---------------------------------------------------------------------------
def siamese_kernel(wslab_ref, xslab_ref, out_ref):
    # ---- weights: static, tile-aligned row slices of the packed slab ------
    w_xproj = wslab_ref[_OFF_XPROJ:_OFF_XPROJ + 128, :]       # (128,128)
    whh = wslab_ref[_OFF_WHH:_OFF_WHH + 2 * H2, :]            # (32,128)
    bias = wslab_ref[_OFF_BIAS:_OFF_BIAS + 1, :]              # (1,128)
    w_att_in = wslab_ref[_OFF_WIN:_OFF_WIN + 2 * H, :]        # (64,128)
    w_att_out = wslab_ref[_OFF_WOUT:_OFF_WOUT + 4 * H, :]     # (128,128)

    whh_bf = whh.astype(jnp.bfloat16)                         # hoisted once

    # ---- hoisted input projection: both sentences, both directions, all
    # timesteps in ONE matmul.  Row t*B+b of each half is already the packed
    # per-step gate input [i_f|i_b|f_f|f_b|g_f|g_b|o_f|o_b] (fwd part from
    # x(t), bwd part from x(T-1-t)) thanks to the wrapper-side row packing.
    gin_all = jnp.dot(xslab_ref[...], w_xproj,
                      preferred_element_type=jnp.float32) + bias   # (2*T*B,128)

    lane32 = lax.broadcasted_iota(jnp.int32, (B, 2 * H2), 1)
    is_fwd = lane32 < H2                                      # (B,32) fwd lanes

    def run(base, h, c):
        # per-step gate inputs are independent of h/c -> fully off the chain
        gins = [gin_all[base + t * B: base + (t + 1) * B] for t in range(T)]
        hs = []
        for t in range(T):            # fully unrolled: 1 bf16 MXU op per step
            gates = gins[t] + jnp.dot(h.astype(jnp.bfloat16), whh_bf,
                                      preferred_element_type=jnp.float32)
            sig = jax.nn.sigmoid(gates)       # one EUP pass over 128 lanes
            tnh = jnp.tanh(gates)             # one EUP pass over 128 lanes
            i = sig[:, 0:32]                  # [i_f | i_b]
            f = sig[:, 32:64]                 # [f_f | f_b]
            g = tnh[:, 64:96]                 # [g_f | g_b]
            o = sig[:, 96:128]                # [o_f | o_b]
            c = f * c + i * g                 # fused fwd|bwd state update
            h = o * jnp.tanh(c)
            hs.append(h)                      # h = [h_f(t) | h_b(T-1-t)]
        # batch-first y, never written to HBM: y[:, t] = [h_f(t) | h_b(t)]
        ys = [jnp.where(is_fwd, hs[t], hs[T - 1 - t]) for t in range(T)]
        y = jnp.stack(ys, axis=1)             # (B, T, H)
        return y, ys[T - 1], h, c             # last output, final (h, c)

    zeros = jnp.zeros((B, 2 * H2), jnp.float32)
    # forward_once(left) from zero hidden
    y_l, hl_last, h_carry, c_carry = run(0, zeros, zeros)
    # forward_once(right) starting from the hidden left behind (self.hidden)
    y_r, hr_last, _, _ = run(T * B, h_carry, c_carry)

    # ---- both SoftDotAttention heads, fused ------------------------------
    # linear_in for both heads in one block-diagonal matmul:
    #   cols 0:32  = target_left  = hr_last @ win_l^T
    #   cols 32:64 = target_right = hl_last @ win_r^T
    h_pair = jnp.concatenate([hr_last, hl_last], axis=1)            # (B,64)
    targets = jnp.dot(h_pair, w_att_in,
                      preferred_element_type=jnp.float32)           # (B,128)
    target_l = targets[:, 0:H]
    target_r = targets[:, H:2 * H]

    def attend(y, target):
        # scores[b,t] = <y[b,t,:], target[b,:]>  (lane reduce on XLU)
        scores = jnp.sum(y * target[:, None, :], axis=2)            # (B,T)
        scores = scores - jnp.max(scores, axis=1, keepdims=True)
        e = jnp.exp(scores)
        attn = e / jnp.sum(e, axis=1, keepdims=True)
        # weighted[b,h] = sum_t attn[b,t] * y[b,t,h]  (sublane reduce on XLU)
        return jnp.sum(attn[:, :, None] * y, axis=1)                # (B,H)

    weighted_l = attend(y_l, target_l)
    weighted_r = attend(y_r, target_r)

    # linear_out for both heads in one block-diagonal matmul + one tanh
    cat_pair = jnp.concatenate([weighted_l, hr_last,
                                weighted_r, hl_last], axis=1)       # (B,128)
    h_star = jnp.tanh(jnp.dot(cat_pair, w_att_out,
                              preferred_element_type=jnp.float32))  # (B,128)
    h_left_star = h_star[:, 0:H]
    h_right_star = h_star[:, H:2 * H]

    # F.pairwise_distance(h_left_star, h_right_star), p=2, eps=1e-6
    diff = h_left_star - h_right_star + 1e-6
    sim = jnp.sqrt(jnp.sum(diff * diff, axis=1))                    # (B,)

    # ---- single lane-dense (8,128) output slab (one unmasked store/DMA) ---
    row = jnp.concatenate(
        [hl_last, hr_last, sim[:, None],
         jnp.zeros((B, 128 - 2 * H - 1), jnp.float32)], axis=1)     # (B,128)
    out_ref[...] = jnp.concatenate(
        [row, jnp.zeros((8 - B, 128), jnp.float32)], axis=0)


# ---------------------------------------------------------------------------
# Wrapper: embedding lookup (glue), weight packing, pallas_call, unpack.
# ---------------------------------------------------------------------------
def _pack_gate_cols(wf_t, wb_t):
    """Interleave per-gate column blocks: [i_f|i_b|f_f|f_b|g_f|g_b|o_f|o_b]."""
    blocks = []
    for k in range(4):
        blocks.append(wf_t[:, k * H2:(k + 1) * H2])
        blocks.append(wb_t[:, k * H2:(k + 1) * H2])
    return jnp.concatenate(blocks, axis=1)


def siamese_forward(sent_l, sent_r, p):
    # embedding lookup (glue) + dropout (identity in eval)
    x_l = p["emb"][sent_l]                                  # (T,B,E)
    x_r = p["emb"][sent_r]

    # ---- x slab: row t*B+b = [x(t,b) | x(T-1-t,b)], left then right -------
    def pack_x(x3):
        xf = x3.reshape(T * B, E)
        xb = x3[::-1].reshape(T * B, E)
        return jnp.concatenate([xf, xb], axis=1)            # (T*B, 2E)

    x2 = jnp.concatenate([pack_x(x_l), pack_x(x_r)], axis=0)        # (32,32)
    xslab = jnp.zeros((2 * T * B, 128), jnp.float32).at[:, :2 * E].set(x2)

    # ---- weight slab -------------------------------------------------------
    zE = jnp.zeros((E, 4 * H2), jnp.float32)
    zH2 = jnp.zeros((H2, 4 * H2), jnp.float32)
    # x-projection weight: rows 0:E feed the fwd gate columns from W_ih_fwd,
    # rows E:2E feed the bwd gate columns from W_ih_bwd (matches the packed
    # [x(t)|x(T-1-t)] rows of xslab).
    w_xproj = jnp.concatenate([_pack_gate_cols(p["wih_f"].T, zE),
                               _pack_gate_cols(zE, p["wih_b"].T)], axis=0)
    w_xproj_pad = jnp.zeros((128, 128), jnp.float32).at[:2 * E, :].set(w_xproj)
    # recurrent weight: block-diagonal over the fused [h_f|h_b] state
    whh_packed = jnp.concatenate([_pack_gate_cols(p["whh_f"].T, zH2),
                                  _pack_gate_cols(zH2, p["whh_b"].T)], axis=0)
    # bias (b_ih + b_hh), packed gate order, padded to 8 rows
    bias_row = _pack_gate_cols((p["bih_f"] + p["bhh_f"])[None, :],
                               (p["bih_b"] + p["bhh_b"])[None, :])  # (1,128)
    bias_blk = jnp.zeros((8, 128), jnp.float32).at[0:1, :].set(bias_row)
    # attention weights: block-diagonal over both heads, padded to 128 lanes
    w_att_in = (jnp.zeros((2 * H, 128), jnp.float32)
                .at[0:H, 0:H].set(p["win_l"].T)
                .at[H:2 * H, H:2 * H].set(p["win_r"].T))
    w_att_out = (jnp.zeros((4 * H, 128), jnp.float32)
                 .at[0:2 * H, 0:H].set(p["wout_l"].T)
                 .at[2 * H:4 * H, H:2 * H].set(p["wout_r"].T))

    wslab = jnp.concatenate(
        [w_xproj_pad, whh_packed, bias_blk, w_att_in, w_att_out], axis=0)
    assert wslab.shape == (_SLAB_ROWS, 128)

    out = pl.pallas_call(
        siamese_kernel,
        out_shape=jax.ShapeDtypeStruct((8, 128), jnp.float32),
    )(wslab, xslab)

    hl_last = out[0:B, 0:H]
    hr_last = out[0:B, H:2 * H]
    sim = out[0:B, 2 * H]
    return hl_last, hr_last, sim


# ---------------------------------------------------------------------------
# Pure-JAX reference (numerical sanity check).  Matmuls use HIGHEST precision;
# the kernel's recurrent matmul is bf16, so tolerance is 2e-2.
# ---------------------------------------------------------------------------
def _lstm_cell_ref(x_t, h, c, wih, whh, bih, bhh):
    gates = (jnp.dot(x_t, wih.T, precision=HI)
             + jnp.dot(h, whh.T, precision=HI) + bih + bhh)
    i, f, g, o = jnp.split(gates, 4, axis=1)
    i, f, g, o = jax.nn.sigmoid(i), jax.nn.sigmoid(f), jnp.tanh(g), jax.nn.sigmoid(o)
    c = f * c + i * g
    h = o * jnp.tanh(c)
    return h, c


def _bilstm_ref(x, h0, c0, p):
    h, c = h0[0], c0[0]
    outs_f = []
    for t in range(T):
        h, c = _lstm_cell_ref(x[t], h, c, p["wih_f"], p["whh_f"], p["bih_f"], p["bhh_f"])
        outs_f.append(h)
    hn_f, cn_f = h, c
    h, c = h0[1], c0[1]
    outs_b = [None] * T
    for t in range(T - 1, -1, -1):
        h, c = _lstm_cell_ref(x[t], h, c, p["wih_b"], p["whh_b"], p["bih_b"], p["bhh_b"])
        outs_b[t] = h
    hn_b, cn_b = h, c
    out = jnp.concatenate([jnp.stack(outs_f), jnp.stack(outs_b)], axis=-1)
    return out, jnp.stack([hn_f, hn_b]), jnp.stack([cn_f, cn_b])


def _soft_dot_ref(y_tbh, h, win, wout):
    y = jnp.transpose(y_tbh, (1, 0, 2))
    target = jnp.dot(h, win.T, precision=HI)
    attn = jnp.einsum("bth,bh->bt", y, target, precision=HI)
    attn = jax.nn.softmax(attn, axis=1)
    weighted = jnp.einsum("bt,bth->bh", attn, y, precision=HI)
    cat = jnp.concatenate([weighted, h], axis=1)
    return jnp.tanh(jnp.dot(cat, wout.T, precision=HI))


def siamese_forward_ref(sent_l, sent_r, p):
    x_l = p["emb"][sent_l]
    x_r = p["emb"][sent_r]
    h0 = jnp.zeros((2, B, H2), jnp.float32)
    c0 = jnp.zeros((2, B, H2), jnp.float32)
    out_l, hn_l, cn_l = _bilstm_ref(x_l, h0, c0, p)
    out_r, _, _ = _bilstm_ref(x_r, hn_l, cn_l, p)
    hls = _soft_dot_ref(out_l, out_r[-1], p["win_l"], p["wout_l"])
    hrs = _soft_dot_ref(out_r, out_l[-1], p["win_r"], p["wout_r"])
    diff = hls - hrs + 1e-6
    sim = jnp.sqrt(jnp.sum(diff * diff, axis=1))
    return out_l[-1], out_r[-1], sim


# ---------------------------------------------------------------------------
if __name__ == "__main__":
    key = jax.random.PRNGKey(0)
    ks = jax.random.split(key, 20)

    def unif(k, shape, scale):
        return jax.random.uniform(k, shape, jnp.float32, -scale, scale)

    kl = 1.0 / np.sqrt(H2)
    params = {
        "emb":    jax.random.normal(ks[0], (V, E), jnp.float32),
        "wih_f":  unif(ks[1], (4 * H2, E), kl),
        "whh_f":  unif(ks[2], (4 * H2, H2), kl),
        "bih_f":  unif(ks[3], (4 * H2,), kl),
        "bhh_f":  unif(ks[4], (4 * H2,), kl),
        "wih_b":  unif(ks[5], (4 * H2, E), kl),
        "whh_b":  unif(ks[6], (4 * H2, H2), kl),
        "bih_b":  unif(ks[7], (4 * H2,), kl),
        "bhh_b":  unif(ks[8], (4 * H2,), kl),
        "win_l":  unif(ks[9], (H, H), 1.0 / np.sqrt(H)),
        "wout_l": unif(ks[10], (H, 2 * H), 1.0 / np.sqrt(2 * H)),
        "win_r":  unif(ks[11], (H, H), 1.0 / np.sqrt(H)),
        "wout_r": unif(ks[12], (H, 2 * H), 1.0 / np.sqrt(2 * H)),
    }

    sent_l = jax.random.randint(ks[13], (T, B), 1, V).astype(jnp.int32)
    sent_r = jax.random.randint(ks[14], (T, B), 1, V).astype(jnp.int32)

    forward = jax.jit(siamese_forward)
    out_left_last, out_right_last, sim = forward(sent_l, sent_r, params)
    jax.block_until_ready((out_left_last, out_right_last, sim))

    # sanity check against a pure-JAX reference (tolerance relaxed to 2e-2
    # because the recurrent matmul runs its operands in bf16 on the MXU)
    ref_l, ref_r, ref_sim = siamese_forward_ref(sent_l, sent_r, params)
    assert np.allclose(np.asarray(out_left_last), np.asarray(ref_l), rtol=2e-2, atol=2e-2)
    assert np.allclose(np.asarray(out_right_last), np.asarray(ref_r), rtol=2e-2, atol=2e-2)
    assert np.allclose(np.asarray(sim), np.asarray(ref_sim), rtol=2e-2, atol=2e-2)

    print("KERNEL_OK")
</pallas_src>

<mosaic_0001>
module attributes {stable_mosaic.version = 11 : i64} {
  func.func @siamese_kernel(%arg0: memref<360x128xf32, #tpu.memory_space<vmem>>, %arg1: memref<32x128xf32, #tpu.memory_space<vmem>>, %arg2: memref<8x128xf32, #tpu.memory_space<vmem>>) attributes {dimension_semantics = [], scalar_prefetch = 0 : i64, scratch_operands = 0 : i64, tpu.core_type = #tpu.core_type<tc>} {
    %c0 = arith.constant 0 : index
    %c0_0 = arith.constant 0 : index
    %0 = vector.load %arg0[%c0, %c0_0] : memref<360x128xf32, #tpu.memory_space<vmem>>, vector<128x128xf32>
    %c128 = arith.constant 128 : index
    %c0_1 = arith.constant 0 : index
    %1 = vector.load %arg0[%c128, %c0_1] : memref<360x128xf32, #tpu.memory_space<vmem>>, vector<32x128xf32>
    %c160 = arith.constant 160 : index
    %c0_2 = arith.constant 0 : index
    %2 = vector.load %arg0[%c160, %c0_2] : memref<360x128xf32, #tpu.memory_space<vmem>>, vector<1x128xf32>
    %c168 = arith.constant 168 : index
    %c0_3 = arith.constant 0 : index
    %3 = vector.load %arg0[%c168, %c0_3] : memref<360x128xf32, #tpu.memory_space<vmem>>, vector<64x128xf32>
    %c232 = arith.constant 232 : index
    %c0_4 = arith.constant 0 : index
    %4 = vector.load %arg0[%c232, %c0_4] : memref<360x128xf32, #tpu.memory_space<vmem>>, vector<128x128xf32>
    %5 = arith.truncf %1 : vector<32x128xf32> to vector<32x128xbf16>
    %c0_5 = arith.constant 0 : index
    %c0_6 = arith.constant 0 : index
    %6 = vector.load %arg1[%c0_5, %c0_6] : memref<32x128xf32, #tpu.memory_space<vmem>>, vector<32x128xf32>
    %cst = arith.constant dense<0.000000e+00> : vector<32x128xf32>
    %7 = tpu.matmul %6, %0, %cst {dimension_numbers = #tpu.dot_dimension_numbers<[1], [0], [0], [1], [0, 0, 1, 1], [], []>} : vector<32x128xf32>, vector<128x128xf32>, vector<32x128xf32> -> vector<32x128xf32>
    %8 = vector.broadcast %2 : vector<1x128xf32> to vector<32x128xf32>
    %9 = arith.addf %7, %8 : vector<32x128xf32>
    %10 = tpu.iota {dimensions = array<i32: 1>} : vector<2x32xi32>
    %c16_i32 = arith.constant 16 : i32
    %11 = vector.broadcast %c16_i32 : i32 to vector<2x32xi32>
    %12 = arith.cmpi slt, %10, %11 : vector<2x32xi32>
    %cst_7 = arith.constant 0.000000e+00 : f32
    %13 = vector.broadcast %cst_7 : f32 to vector<2x32xf32>
    %14 = vector.extract_strided_slice %9 {offsets = [0, 0], sizes = [2, 128], strides = [1, 1]} : vector<32x128xf32> to vector<2x128xf32>
    %15 = vector.extract_strided_slice %9 {offsets = [2, 0], sizes = [2, 128], strides = [1, 1]} : vector<32x128xf32> to vector<2x128xf32>
    %16 = vector.extract_strided_slice %9 {offsets = [4, 0], sizes = [2, 128], strides = [1, 1]} : vector<32x128xf32> to vector<2x128xf32>
    %17 = vector.extract_strided_slice %9 {offsets = [6, 0], sizes = [2, 128], strides = [1, 1]} : vector<32x128xf32> to vector<2x128xf32>
    %18 = vector.extract_strided_slice %9 {offsets = [8, 0], sizes = [2, 128], strides = [1, 1]} : vector<32x128xf32> to vector<2x128xf32>
    %19 = vector.extract_strided_slice %9 {offsets = [10, 0], sizes = [2, 128], strides = [1, 1]} : vector<32x128xf32> to vector<2x128xf32>
    %20 = vector.extract_strided_slice %9 {offsets = [12, 0], sizes = [2, 128], strides = [1, 1]} : vector<32x128xf32> to vector<2x128xf32>
    %21 = vector.extract_strided_slice %9 {offsets = [14, 0], sizes = [2, 128], strides = [1, 1]} : vector<32x128xf32> to vector<2x128xf32>
    %22 = arith.truncf %13 : vector<2x32xf32> to vector<2x32xbf16>
    %cst_8 = arith.constant dense<0.000000e+00> : vector<2x128xf32>
    %23 = tpu.matmul %22, %5, %cst_8 {dimension_numbers = #tpu.dot_dimension_numbers<[1], [0], [0], [1], [0, 0, 1, 1], [], []>} : vector<2x32xbf16>, vector<32x128xbf16>, vector<2x128xf32> -> vector<2x128xf32>
    %24 = arith.addf %14, %23 : vector<2x128xf32>
    %25 = arith.negf %24 : vector<2x128xf32>
    %26 = math.exp %25 : vector<2x128xf32>
    %cst_9 = arith.constant 1.000000e+00 : f32
    %27 = vector.broadcast %cst_9 : f32 to vector<2x128xf32>
    %28 = arith.addf %27, %26 : vector<2x128xf32>
    %29 = arith.divf %27, %28 : vector<2x128xf32>
    %30 = math.tanh %24 : vector<2x128xf32>
    %31 = vector.extract_strided_slice %29 {offsets = [0, 0], sizes = [2, 32], strides = [1, 1]} : vector<2x128xf32> to vector<2x32xf32>
    %32 = vector.extract_strided_slice %29 {offsets = [0, 32], sizes = [2, 32], strides = [1, 1]} : vector<2x128xf32> to vector<2x32xf32>
    %33 = vector.extract_strided_slice %30 {offsets = [0, 64], sizes = [2, 32], strides = [1, 1]} : vector<2x128xf32> to vector<2x32xf32>
    %34 = vector.extract_strided_slice %29 {offsets = [0, 96], sizes = [2, 32], strides = [1, 1]} : vector<2x128xf32> to vector<2x32xf32>
    %35 = arith.mulf %32, %13 : vector<2x32xf32>
    %36 = arith.mulf %31, %33 : vector<2x32xf32>
    %37 = arith.addf %35, %36 : vector<2x32xf32>
    %38 = math.tanh %37 : vector<2x32xf32>
    %39 = arith.mulf %34, %38 : vector<2x32xf32>
    %40 = arith.truncf %39 : vector<2x32xf32> to vector<2x32xbf16>
    %cst_10 = arith.constant dense<0.000000e+00> : vector<2x128xf32>
    %41 = tpu.matmul %40, %5, %cst_10 {dimension_numbers = #tpu.dot_dimension_numbers<[1], [0], [0], [1], [0, 0, 1, 1], [], []>} : vector<2x32xbf16>, vector<32x128xbf16>, vector<2x128xf32> -> vector<2x128xf32>
    %42 = arith.addf %15, %41 : vector<2x128xf32>
    %43 = arith.negf %42 : vector<2x128xf32>
    %44 = math.exp %43 : vector<2x128xf32>
    %cst_11 = arith.constant 1.000000e+00 : f32
    %45 = vector.broadcast %cst_11 : f32 to vector<2x128xf32>
    %46 = arith.addf %45, %44 : vector<2x128xf32>
    %47 = arith.divf %45, %46 : vector<2x128xf32>
    %48 = math.tanh %42 : vector<2x128xf32>
    %49 = vector.extract_strided_slice %47 {offsets = [0, 0], sizes = [2, 32], strides = [1, 1]} : vector<2x128xf32> to vector<2x32xf32>
    %50 = vector.extract_strided_slice %47 {offsets = [0, 32], sizes = [2, 32], strides = [1, 1]} : vector<2x128xf32> to vector<2x32xf32>
    %51 = vector.extract_strided_slice %48 {offsets = [0, 64], sizes = [2, 32], strides = [1, 1]} : vector<2x128xf32> to vector<2x32xf32>
    %52 = vector.extract_strided_slice %47 {offsets = [0, 96], sizes = [2, 32], strides = [1, 1]} : vector<2x128xf32> to vector<2x32xf32>
    %53 = arith.mulf %50, %37 : vector<2x32xf32>
    %54 = arith.mulf %49, %51 : vector<2x32xf32>
    %55 = arith.addf %53, %54 : vector<2x32xf32>
    %56 = math.tanh %55 : vector<2x32xf32>
    %57 = arith.mulf %52, %56 : vector<2x32xf32>
    %58 = arith.truncf %57 : vector<2x32xf32> to vector<2x32xbf16>
    %cst_12 = arith.constant dense<0.000000e+00> : vector<2x128xf32>
    %59 = tpu.matmul %58, %5, %cst_12 {dimension_numbers = #tpu.dot_dimension_numbers<[1], [0], [0], [1], [0, 0, 1, 1], [], []>} : vector<2x32xbf16>, vector<32x128xbf16>, vector<2x128xf32> -> vector<2x128xf32>
    %60 = arith.addf %16, %59 : vector<2x128xf32>
    %61 = arith.negf %60 : vector<2x128xf32>
    %62 = math.exp %61 : vector<2x128xf32>
    %cst_13 = arith.constant 1.000000e+00 : f32
    %63 = vector.broadcast %cst_13 : f32 to vector<2x128xf32>
    %64 = arith.addf %63, %62 : vector<2x128xf32>
    %65 = arith.divf %63, %64 : vector<2x128xf32>
    %66 = math.tanh %60 : vector<2x128xf32>
    %67 = vector.extract_strided_slice %65 {offsets = [0, 0], sizes = [2, 32], strides = [1, 1]} : vector<2x128xf32> to vector<2x32xf32>
    %68 = vector.extract_strided_slice %65 {offsets = [0, 32], sizes = [2, 32], strides = [1, 1]} : vector<2x128xf32> to vector<2x32xf32>
    %69 = vector.extract_strided_slice %66 {offsets = [0, 64], sizes = [2, 32], strides = [1, 1]} : vector<2x128xf32> to vector<2x32xf32>
    %70 = vector.extract_strided_slice %65 {offsets = [0, 96], sizes = [2, 32], strides = [1, 1]} : vector<2x128xf32> to vector<2x32xf32>
    %71 = arith.mulf %68, %55 : vector<2x32xf32>
    %72 = arith.mulf %67, %69 : vector<2x32xf32>
    %73 = arith.addf %71, %72 : vector<2x32xf32>
    %74 = math.tanh %73 : vector<2x32xf32>
    %75 = arith.mulf %70, %74 : vector<2x32xf32>
    %76 = arith.truncf %75 : vector<2x32xf32> to vector<2x32xbf16>
    %cst_14 = arith.constant dense<0.000000e+00> : vector<2x128xf32>
    %77 = tpu.matmul %76, %5, %cst_14 {dimension_numbers = #tpu.dot_dimension_numbers<[1], [0], [0], [1], [0, 0, 1, 1], [], []>} : vector<2x32xbf16>, vector<32x128xbf16>, vector<2x128xf32> -> vector<2x128xf32>
    %78 = arith.addf %17, %77 : vector<2x128xf32>
    %79 = arith.negf %78 : vector<2x128xf32>
    %80 = math.exp %79 : vector<2x128xf32>
    %cst_15 = arith.constant 1.000000e+00 : f32
    %81 = vector.broadcast %cst_15 : f32 to vector<2x128xf32>
    %82 = arith.addf %81, %80 : vector<2x128xf32>
    %83 = arith.divf %81, %82 : vector<2x128xf32>
    %84 = math.tanh %78 : vector<2x128xf32>
    %85 = vector.extract_strided_slice %83 {offsets = [0, 0], sizes = [2, 32], strides = [1, 1]} : vector<2x128xf32> to vector<2x32xf32>
    %86 = vector.extract_strided_slice %83 {offsets = [0, 32], sizes = [2, 32], strides = [1, 1]} : vector<2x128xf32> to vector<2x32xf32>
    %87 = vector.extract_strided_slice %84 {offsets = [0, 64], sizes = [2, 32], strides = [1, 1]} : vector<2x128xf32> to vector<2x32xf32>
    %88 = vector.extract_strided_slice %83 {offsets = [0, 96], sizes = [2, 32], strides = [1, 1]} : vector<2x128xf32> to vector<2x32xf32>
    %89 = arith.mulf %86, %73 : vector<2x32xf32>
    %90 = arith.mulf %85, %87 : vector<2x32xf32>
    %91 = arith.addf %89, %90 : vector<2x32xf32>
    %92 = math.tanh %91 : vector<2x32xf32>
    %93 = arith.mulf %88, %92 : vector<2x32xf32>
    %94 = arith.truncf %93 : vector<2x32xf32> to vector<2x32xbf16>
    %cst_16 = arith.constant dense<0.000000e+00> : vector<2x128xf32>
    %95 = tpu.matmul %94, %5, %cst_16 {dimension_numbers = #tpu.dot_dimension_numbers<[1], [0], [0], [1], [0, 0, 1, 1], [], []>} : vector<2x32xbf16>, vector<32x128xbf16>, vector<2x128xf32> -> vector<2x128xf32>
    %96 = arith.addf %18, %95 : vector<2x128xf32>
    %97 = arith.negf %96 : vector<2x128xf32>
    %98 = math.exp %97 : vector<2x128xf32>
    %cst_17 = arith.constant 1.000000e+00 : f32
    %99 = vector.broadcast %cst_17 : f32 to vector<2x128xf32>
    %100 = arith.addf %99, %98 : vector<2x128xf32>
    %101 = arith.divf %99, %100 : vector<2x128xf32>
    %102 = math.tanh %96 : vector<2x128xf32>
    %103 = vector.extract_strided_slice %101 {offsets = [0, 0], sizes = [2, 32], strides = [1, 1]} : vector<2x128xf32> to vector<2x32xf32>
    %104 = vector.extract_strided_slice %101 {offsets = [0, 32], sizes = [2, 32], strides = [1, 1]} : vector<2x128xf32> to vector<2x32xf32>
    %105 = vector.extract_strided_slice %102 {offsets = [0, 64], sizes = [2, 32], strides = [1, 1]} : vector<2x128xf32> to vector<2x32xf32>
    %106 = vector.extract_strided_slice %101 {offsets = [0, 96], sizes = [2, 32], strides = [1, 1]} : vector<2x128xf32> to vector<2x32xf32>
    %107 = arith.mulf %104, %91 : vector<2x32xf32>
    %108 = arith.mulf %103, %105 : vector<2x32xf32>
    %109 = arith.addf %107, %108 : vector<2x32xf32>
    %110 = math.tanh %109 : vector<2x32xf32>
    %111 = arith.mulf %106, %110 : vector<2x32xf32>
    %112 = arith.truncf %111 : vector<2x32xf32> to vector<2x32xbf16>
    %cst_18 = arith.constant dense<0.000000e+00> : vector<2x128xf32>
    %113 = tpu.matmul %112, %5, %cst_18 {dimension_numbers = #tpu.dot_dimension_numbers<[1], [0], [0], [1], [0, 0, 1, 1], [], []>} : vector<2x32xbf16>, vector<32x128xbf16>, vector<2x128xf32> -> vector<2x128xf32>
    %114 = arith.addf %19, %113 : vector<2x128xf32>
    %115 = arith.negf %114 : vector<2x128xf32>
    %116 = math.exp %115 : vector<2x128xf32>
    %cst_19 = arith.constant 1.000000e+00 : f32
    %117 = vector.broadcast %cst_19 : f32 to vector<2x128xf32>
    %118 = arith.addf %117, %116 : vector<2x128xf32>
    %119 = arith.divf %117, %118 : vector<2x128xf32>
    %120 = math.tanh %114 : vector<2x128xf32>
    %121 = vector.extract_strided_slice %119 {offsets = [0, 0], sizes = [2, 32], strides = [1, 1]} : vector<2x128xf32> to vector<2x32xf32>
    %122 = vector.extract_strided_slice %119 {offsets = [0, 32], sizes = [2, 32], strides = [1, 1]} : vector<2x128xf32> to vector<2x32xf32>
    %123 = vector.extract_strided_slice %120 {offsets = [0, 64], sizes = [2, 32], strides = [1, 1]} : vector<2x128xf32> to vector<2x32xf32>
    %124 = vector.extract_strided_slice %119 {offsets = [0, 96], sizes = [2, 32], strides = [1, 1]} : vector<2x128xf32> to vector<2x32xf32>
    %125 = arith.mulf %122, %109 : vector<2x32xf32>
    %126 = arith.mulf %121, %123 : vector<2x32xf32>
    %127 = arith.addf %125, %126 : vector<2x32xf32>
    %128 = math.tanh %127 : vector<2x32xf32>
    %129 = arith.mulf %124, %128 : vector<2x32xf32>
    %130 = arith.truncf %129 : vector<2x32xf32> to vector<2x32xbf16>
    %cst_20 = arith.constant dense<0.000000e+00> : vector<2x128xf32>
    %131 = tpu.matmul %130, %5, %cst_20 {dimension_numbers = #tpu.dot_dimension_numbers<[1], [0], [0], [1], [0, 0, 1, 1], [], []>} : vector<2x32xbf16>, vector<32x128xbf16>, vector<2x128xf32> -> vector<2x128xf32>
    %132 = arith.addf %20, %131 : vector<2x128xf32>
    %133 = arith.negf %132 : vector<2x128xf32>
    %134 = math.exp %133 : vector<2x128xf32>
    %cst_21 = arith.constant 1.000000e+00 : f32
    %135 = vector.broadcast %cst_21 : f32 to vector<2x128xf32>
    %136 = arith.addf %135, %134 : vector<2x128xf32>
    %137 = arith.divf %135, %136 : vector<2x128xf32>
    %138 = math.tanh %132 : vector<2x128xf32>
    %139 = vector.extract_strided_slice %137 {offsets = [0, 0], sizes = [2, 32], strides = [1, 1]} : vector<2x128xf32> to vector<2x32xf32>
    %140 = vector.extract_strided_slice %137 {offsets = [0, 32], sizes = [2, 32], strides = [1, 1]} : vector<2x128xf32> to vector<2x32xf32>
    %141 = vector.extract_strided_slice %138 {offsets = [0, 64], sizes = [2, 32], strides = [1, 1]} : vector<2x128xf32> to vector<2x32xf32>
    %142 = vector.extract_strided_slice %137 {offsets = [0, 96], sizes = [2, 32], strides = [1, 1]} : vector<2x128xf32> to vector<2x32xf32>
    %143 = arith.mulf %140, %127 : vector<2x32xf32>
    %144 = arith.mulf %139, %141 : vector<2x32xf32>
    %145 = arith.addf %143, %144 : vector<2x32xf32>
    %146 = math.tanh %145 : vector<2x32xf32>
    %147 = arith.mulf %142, %146 : vector<2x32xf32>
    %148 = arith.truncf %147 : vector<2x32xf32> to vector<2x32xbf16>
    %cst_22 = arith.constant dense<0.000000e+00> : vector<2x128xf32>
    %149 = tpu.matmul %148, %5, %cst_22 {dimension_numbers = #tpu.dot_dimension_numbers<[1], [0], [0], [1], [0, 0, 1, 1], [], []>} : vector<2x32xbf16>, vector<32x128xbf16>, vector<2x128xf32> -> vector<2x128xf32>
    %150 = arith.addf %21, %149 : vector<2x128xf32>
    %151 = arith.negf %150 : vector<2x128xf32>
    %152 = math.exp %151 : vector<2x128xf32>
    %cst_23 = arith.constant 1.000000e+00 : f32
    %153 = vector.broadcast %cst_23 : f32 to vector<2x128xf32>
    %154 = arith.addf %153, %152 : vector<2x128xf32>
    %155 = arith.divf %153, %154 : vector<2x128xf32>
    %156 = math.tanh %150 : vector<2x128xf32>
    %157 = vector.extract_strided_slice %155 {offsets = [0, 0], sizes = [2, 32], strides = [1, 1]} : vector<2x128xf32> to vector<2x32xf32>
    %158 = vector.extract_strided_slice %155 {offsets = [0, 32], sizes = [2, 32], strides = [1, 1]} : vector<2x128xf32> to vector<2x32xf32>
    %159 = vector.extract_strided_slice %156 {offsets = [0, 64], sizes = [2, 32], strides = [1, 1]} : vector<2x128xf32> to vector<2x32xf32>
    %160 = vector.extract_strided_slice %155 {offsets = [0, 96], sizes = [2, 32], strides = [1, 1]} : vector<2x128xf32> to vector<2x32xf32>
    %161 = arith.mulf %158, %145 : vector<2x32xf32>
    %162 = arith.mulf %157, %159 : vector<2x32xf32>
    %163 = arith.addf %161, %162 : vector<2x32xf32>
    %164 = math.tanh %163 : vector<2x32xf32>
    %165 = arith.mulf %160, %164 : vector<2x32xf32>
    %166 = arith.select %12, %39, %165 : vector<2x32xi1>, vector<2x32xf32>
    %167 = arith.select %12, %57, %147 : vector<2x32xi1>, vector<2x32xf32>
    %168 = arith.select %12, %75, %129 : vector<2x32xi1>, vector<2x32xf32>
    %169 = arith.select %12, %93, %111 : vector<2x32xi1>, vector<2x32xf32>
    %170 = arith.select %12, %111, %93 : vector<2x32xi1>, vector<2x32xf32>
    %171 = arith.select %12, %129, %75 : vector<2x32xi1>, vector<2x32xf32>
    %172 = arith.select %12, %147, %57 : vector<2x32xi1>, vector<2x32xf32>
    %173 = arith.select %12, %165, %39 : vector<2x32xi1>, vector<2x32xf32>
    %174 = vector.shape_cast %166 : vector<2x32xf32> to vector<2x1x32xf32>
    %175 = vector.shape_cast %167 : vector<2x32xf32> to vector<2x1x32xf32>
    %176 = vector.shape_cast %168 : vector<2x32xf32> to vector<2x1x32xf32>
    %177 = vector.shape_cast %169 : vector<2x32xf32> to vector<2x1x32xf32>
    %178 = vector.shape_cast %170 : vector<2x32xf32> to vector<2x1x32xf32>
    %179 = vector.shape_cast %171 : vector<2x32xf32> to vector<2x1x32xf32>
    %180 = vector.shape_cast %172 : vector<2x32xf32> to vector<2x1x32xf32>
    %181 = vector.shape_cast %173 : vector<2x32xf32> to vector<2x1x32xf32>
    %182 = tpu.concatenate %174, %175, %176, %177, %178, %179, %180, %181 in 1 : vector<2x1x32xf32>, vector<2x1x32xf32>, vector<2x1x32xf32>, vector<2x1x32xf32>, vector<2x1x32xf32>, vector<2x1x32xf32>, vector<2x1x32xf32>, vector<2x1x32xf32> -> vector<2x8x32xf32>
    %183 = vector.extract_strided_slice %9 {offsets = [16, 0], sizes = [2, 128], strides = [1, 1]} : vector<32x128xf32> to vector<2x128xf32>
    %184 = vector.extract_strided_slice %9 {offsets = [18, 0], sizes = [2, 128], strides = [1, 1]} : vector<32x128xf32> to vector<2x128xf32>
    %185 = vector.extract_strided_slice %9 {offsets = [20, 0], sizes = [2, 128], strides = [1, 1]} : vector<32x128xf32> to vector<2x128xf32>
    %186 = vector.extract_strided_slice %9 {offsets = [22, 0], sizes = [2, 128], strides = [1, 1]} : vector<32x128xf32> to vector<2x128xf32>
    %187 = vector.extract_strided_slice %9 {offsets = [24, 0], sizes = [2, 128], strides = [1, 1]} : vector<32x128xf32> to vector<2x128xf32>
    %188 = vector.extract_strided_slice %9 {offsets = [26, 0], sizes = [2, 128], strides = [1, 1]} : vector<32x128xf32> to vector<2x128xf32>
    %189 = vector.extract_strided_slice %9 {offsets = [28, 0], sizes = [2, 128], strides = [1, 1]} : vector<32x128xf32> to vector<2x128xf32>
    %190 = vector.extract_strided_slice %9 {offsets = [30, 0], sizes = [2, 128], strides = [1, 1]} : vector<32x128xf32> to vector<2x128xf32>
    %191 = arith.truncf %165 : vector<2x32xf32> to vector<2x32xbf16>
    %cst_24 = arith.constant dense<0.000000e+00> : vector<2x128xf32>
    %192 = tpu.matmul %191, %5, %cst_24 {dimension_numbers = #tpu.dot_dimension_numbers<[1], [0], [0], [1], [0, 0, 1, 1], [], []>} : vector<2x32xbf16>, vector<32x128xbf16>, vector<2x128xf32> -> vector<2x128xf32>
    %193 = arith.addf %183, %192 : vector<2x128xf32>
    %194 = arith.negf %193 : vector<2x128xf32>
    %195 = math.exp %194 : vector<2x128xf32>
    %cst_25 = arith.constant 1.000000e+00 : f32
    %196 = vector.broadcast %cst_25 : f32 to vector<2x128xf32>
    %197 = arith.addf %196, %195 : vector<2x128xf32>
    %198 = arith.divf %196, %197 : vector<2x128xf32>
    %199 = math.tanh %193 : vector<2x128xf32>
    %200 = vector.extract_strided_slice %198 {offsets = [0, 0], sizes = [2, 32], strides = [1, 1]} : vector<2x128xf32> to vector<2x32xf32>
    %201 = vector.extract_strided_slice %198 {offsets = [0, 32], sizes = [2, 32], strides = [1, 1]} : vector<2x128xf32> to vector<2x32xf32>
    %202 = vector.extract_strided_slice %199 {offsets = [0, 64], sizes = [2, 32], strides = [1, 1]} : vector<2x128xf32> to vector<2x32xf32>
    %203 = vector.extract_strided_slice %198 {offsets = [0, 96], sizes = [2, 32], strides = [1, 1]} : vector<2x128xf32> to vector<2x32xf32>
    %204 = arith.mulf %201, %163 : vector<2x32xf32>
    %205 = arith.mulf %200, %202 : vector<2x32xf32>
    %206 = arith.addf %204, %205 : vector<2x32xf32>
    %207 = math.tanh %206 : vector<2x32xf32>
    %208 = arith.mulf %203, %207 : vector<2x32xf32>
    %209 = arith.truncf %208 : vector<2x32xf32> to vector<2x32xbf16>
    %cst_26 = arith.constant dense<0.000000e+00> : vector<2x128xf32>
    %210 = tpu.matmul %209, %5, %cst_26 {dimension_numbers = #tpu.dot_dimension_numbers<[1], [0], [0], [1], [0, 0, 1, 1], [], []>} : vector<2x32xbf16>, vector<32x128xbf16>, vector<2x128xf32> -> vector<2x128xf32>
    %211 = arith.addf %184, %210 : vector<2x128xf32>
    %212 = arith.negf %211 : vector<2x128xf32>
    %213 = math.exp %212 : vector<2x128xf32>
    %cst_27 = arith.constant 1.000000e+00 : f32
    %214 = vector.broadcast %cst_27 : f32 to vector<2x128xf32>
    %215 = arith.addf %214, %213 : vector<2x128xf32>
    %216 = arith.divf %214, %215 : vector<2x128xf32>
    %217 = math.tanh %211 : vector<2x128xf32>
    %218 = vector.extract_strided_slice %216 {offsets = [0, 0], sizes = [2, 32], strides = [1, 1]} : vector<2x128xf32> to vector<2x32xf32>
    %219 = vector.extract_strided_slice %216 {offsets = [0, 32], sizes = [2, 32], strides = [1, 1]} : vector<2x128xf32> to vector<2x32xf32>
    %220 = vector.extract_strided_slice %217 {offsets = [0, 64], sizes = [2, 32], strides = [1, 1]} : vector<2x128xf32> to vector<2x32xf32>
    %221 = vector.extract_strided_slice %216 {offsets = [0, 96], sizes = [2, 32], strides = [1, 1]} : vector<2x128xf32> to vector<2x32xf32>
    %222 = arith.mulf %219, %206 : vector<2x32xf32>
    %223 = arith.mulf %218, %220 : vector<2x32xf32>
    %224 = arith.addf %222, %223 : vector<2x32xf32>
    %225 = math.tanh %224 : vector<2x32xf32>
    %226 = arith.mulf %221, %225 : vector<2x32xf32>
    %227 = arith.truncf %226 : vector<2x32xf32> to vector<2x32xbf16>
    %cst_28 = arith.constant dense<0.000000e+00> : vector<2x128xf32>
    %228 = tpu.matmul %227, %5, %cst_28 {dimension_numbers = #tpu.dot_dimension_numbers<[1], [0], [0], [1], [0, 0, 1, 1], [], []>} : vector<2x32xbf16>, vector<32x128xbf16>, vector<2x128xf32> -> vector<2x128xf32>
    %229 = arith.addf %185, %228 : vector<2x128xf32>
    %230 = arith.negf %229 : vector<2x128xf32>
    %231 = math.exp %230 : vector<2x128xf32>
    %cst_29 = arith.constant 1.000000e+00 : f32
    %232 = vector.broadcast %cst_29 : f32 to vector<2x128xf32>
    %233 = arith.addf %232, %231 : vector<2x128xf32>
    %234 = arith.divf %232, %233 : vector<2x128xf32>
    %235 = math.tanh %229 : vector<2x128xf32>
    %236 = vector.extract_strided_slice %234 {offsets = [0, 0], sizes = [2, 32], strides = [1, 1]} : vector<2x128xf32> to vector<2x32xf32>
    %237 = vector.extract_strided_slice %234 {offsets = [0, 32], sizes = [2, 32], strides = [1, 1]} : vector<2x128xf32> to vector<2x32xf32>
    %238 = vector.extract_strided_slice %235 {offsets = [0, 64], sizes = [2, 32], strides = [1, 1]} : vector<2x128xf32> to vector<2x32xf32>
    %239 = vector.extract_strided_slice %234 {offsets = [0, 96], sizes = [2, 32], strides = [1, 1]} : vector<2x128xf32> to vector<2x32xf32>
    %240 = arith.mulf %237, %224 : vector<2x32xf32>
    %241 = arith.mulf %236, %238 : vector<2x32xf32>
    %242 = arith.addf %240, %241 : vector<2x32xf32>
    %243 = math.tanh %242 : vector<2x32xf32>
    %244 = arith.mulf %239, %243 : vector<2x32xf32>
    %245 = arith.truncf %244 : vector<2x32xf32> to vector<2x32xbf16>
    %cst_30 = arith.constant dense<0.000000e+00> : vector<2x128xf32>
    %246 = tpu.matmul %245, %5, %cst_30 {dimension_numbers = #tpu.dot_dimension_numbers<[1], [0], [0], [1], [0, 0, 1, 1], [], []>} : vector<2x32xbf16>, vector<32x128xbf16>, vector<2x128xf32> -> vector<2x128xf32>
    %247 = arith.addf %186, %246 : vector<2x128xf32>
    %248 = arith.negf %247 : vector<2x128xf32>
    %249 = math.exp %248 : vector<2x128xf32>
    %cst_31 = arith.constant 1.000000e+00 : f32
    %250 = vector.broadcast %cst_31 : f32 to vector<2x128xf32>
    %251 = arith.addf %250, %249 : vector<2x128xf32>
    %252 = arith.divf %250, %251 : vector<2x128xf32>
    %253 = math.tanh %247 : vector<2x128xf32>
    %254 = vector.extract_strided_slice %252 {offsets = [0, 0], sizes = [2, 32], strides = [1, 1]} : vector<2x128xf32> to vector<2x32xf32>
    %255 = vector.extract_strided_slice %252 {offsets = [0, 32], sizes = [2, 32], strides = [1, 1]} : vector<2x128xf32> to vector<2x32xf32>
    %256 = vector.extract_strided_slice %253 {offsets = [0, 64], sizes = [2, 32], strides = [1, 1]} : vector<2x128xf32> to vector<2x32xf32>
    %257 = vector.extract_strided_slice %252 {offsets = [0, 96], sizes = [2, 32], strides = [1, 1]} : vector<2x128xf32> to vector<2x32xf32>
    %258 = arith.mulf %255, %242 : vector<2x32xf32>
    %259 = arith.mulf %254, %256 : vector<2x32xf32>
    %260 = arith.addf %258, %259 : vector<2x32xf32>
    %261 = math.tanh %260 : vector<2x32xf32>
    %262 = arith.mulf %257, %261 : vector<2x32xf32>
    %263 = arith.truncf %262 : vector<2x32xf32> to vector<2x32xbf16>
    %cst_32 = arith.constant dense<0.000000e+00> : vector<2x128xf32>
    %264 = tpu.matmul %263, %5, %cst_32 {dimension_numbers = #tpu.dot_dimension_numbers<[1], [0], [0], [1], [0, 0, 1, 1], [], []>} : vector<2x32xbf16>, vector<32x128xbf16>, vector<2x128xf32> -> vector<2x128xf32>
    %265 = arith.addf %187, %264 : vector<2x128xf32>
    %266 = arith.negf %265 : vector<2x128xf32>
    %267 = math.exp %266 : vector<2x128xf32>
    %cst_33 = arith.constant 1.000000e+00 : f32
    %268 = vector.broadcast %cst_33 : f32 to vector<2x128xf32>
    %269 = arith.addf %268, %267 : vector<2x128xf32>
    %270 = arith.divf %268, %269 : vector<2x128xf32>
    %271 = math.tanh %265 : vector<2x128xf32>
    %272 = vector.extract_strided_slice %270 {offsets = [0, 0], sizes = [2, 32], strides = [1, 1]} : vector<2x128xf32> to vector<2x32xf32>
    %273 = vector.extract_strided_slice %270 {offsets = [0, 32], sizes = [2, 32], strides = [1, 1]} : vector<2x128xf32> to vector<2x32xf32>
    %274 = vector.extract_strided_slice %271 {offsets = [0, 64], sizes = [2, 32], strides = [1, 1]} : vector<2x128xf32> to vector<2x32xf32>
    %275 = vector.extract_strided_slice %270 {offsets = [0, 96], sizes = [2, 32], strides = [1, 1]} : vector<2x128xf32> to vector<2x32xf32>
    %276 = arith.mulf %273, %260 : vector<2x32xf32>
    %277 = arith.mulf %272, %274 : vector<2x32xf32>
    %278 = arith.addf %276, %277 : vector<2x32xf32>
    %279 = math.tanh %278 : vector<2x32xf32>
    %280 = arith.mulf %275, %279 : vector<2x32xf32>
    %281 = arith.truncf %280 : vector<2x32xf32> to vector<2x32xbf16>
    %cst_34 = arith.constant dense<0.000000e+00> : vector<2x128xf32>
    %282 = tpu.matmul %281, %5, %cst_34 {dimension_numbers = #tpu.dot_dimension_numbers<[1], [0], [0], [1], [0, 0, 1, 1], [], []>} : vector<2x32xbf16>, vector<32x128xbf16>, vector<2x128xf32> -> vector<2x128xf32>
    %283 = arith.addf %188, %282 : vector<2x128xf32>
    %284 = arith.negf %283 : vector<2x128xf32>
    %285 = math.exp %284 : vector<2x128xf32>
    %cst_35 = arith.constant 1.000000e+00 : f32
    %286 = vector.broadcast %cst_35 : f32 to vector<2x128xf32>
    %287 = arith.addf %286, %285 : vector<2x128xf32>
    %288 = arith.divf %286, %287 : vector<2x128xf32>
    %289 = math.tanh %283 : vector<2x128xf32>
    %290 = vector.extract_strided_slice %288 {offsets = [0, 0], sizes = [2, 32], strides = [1, 1]} : vector<2x128xf32> to vector<2x32xf32>
    %291 = vector.extract_strided_slice %288 {offsets = [0, 32], sizes = [2, 32], strides = [1, 1]} : vector<2x128xf32> to vector<2x32xf32>
    %292 = vector.extract_strided_slice %289 {offsets = [0, 64], sizes = [2, 32], strides = [1, 1]} : vector<2x128xf32> to vector<2x32xf32>
    %293 = vector.extract_strided_slice %288 {offsets = [0, 96], sizes = [2, 32], strides = [1, 1]} : vector<2x128xf32> to vector<2x32xf32>
    %294 = arith.mulf %291, %278 : vector<2x32xf32>
    %295 = arith.mulf %290, %292 : vector<2x32xf32>
    %296 = arith.addf %294, %295 : vector<2x32xf32>
    %297 = math.tanh %296 : vector<2x32xf32>
    %298 = arith.mulf %293, %297 : vector<2x32xf32>
    %299 = arith.truncf %298 : vector<2x32xf32> to vector<2x32xbf16>
    %cst_36 = arith.constant dense<0.000000e+00> : vector<2x128xf32>
    %300 = tpu.matmul %299, %5, %cst_36 {dimension_numbers = #tpu.dot_dimension_numbers<[1], [0], [0], [1], [0, 0, 1, 1], [], []>} : vector<2x32xbf16>, vector<32x128xbf16>, vector<2x128xf32> -> vector<2x128xf32>
    %301 = arith.addf %189, %300 : vector<2x128xf32>
    %302 = arith.negf %301 : vector<2x128xf32>
    %303 = math.exp %302 : vector<2x128xf32>
    %cst_37 = arith.constant 1.000000e+00 : f32
    %304 = vector.broadcast %cst_37 : f32 to vector<2x128xf32>
    %305 = arith.addf %304, %303 : vector<2x128xf32>
    %306 = arith.divf %304, %305 : vector<2x128xf32>
    %307 = math.tanh %301 : vector<2x128xf32>
    %308 = vector.extract_strided_slice %306 {offsets = [0, 0], sizes = [2, 32], strides = [1, 1]} : vector<2x128xf32> to vector<2x32xf32>
    %309 = vector.extract_strided_slice %306 {offsets = [0, 32], sizes = [2, 32], strides = [1, 1]} : vector<2x128xf32> to vector<2x32xf32>
    %310 = vector.extract_strided_slice %307 {offsets = [0, 64], sizes = [2, 32], strides = [1, 1]} : vector<2x128xf32> to vector<2x32xf32>
    %311 = vector.extract_strided_slice %306 {offsets = [0, 96], sizes = [2, 32], strides = [1, 1]} : vector<2x128xf32> to vector<2x32xf32>
    %312 = arith.mulf %309, %296 : vector<2x32xf32>
    %313 = arith.mulf %308, %310 : vector<2x32xf32>
    %314 = arith.addf %312, %313 : vector<2x32xf32>
    %315 = math.tanh %314 : vector<2x32xf32>
    %316 = arith.mulf %311, %315 : vector<2x32xf32>
    %317 = arith.truncf %316 : vector<2x32xf32> to vector<2x32xbf16>
    %cst_38 = arith.constant dense<0.000000e+00> : vector<2x128xf32>
    %318 = tpu.matmul %317, %5, %cst_38 {dimension_numbers = #tpu.dot_dimension_numbers<[1], [0], [0], [1], [0, 0, 1, 1], [], []>} : vector<2x32xbf16>, vector<32x128xbf16>, vector<2x128xf32> -> vector<2x128xf32>
    %319 = arith.addf %190, %318 : vector<2x128xf32>
    %320 = arith.negf %319 : vector<2x128xf32>
    %321 = math.exp %320 : vector<2x128xf32>
    %cst_39 = arith.constant 1.000000e+00 : f32
    %322 = vector.broadcast %cst_39 : f32 to vector<2x128xf32>
    %323 = arith.addf %322, %321 : vector<2x128xf32>
    %324 = arith.divf %322, %323 : vector<2x128xf32>
    %325 = math.tanh %319 : vector<2x128xf32>
    %326 = vector.extract_strided_slice %324 {offsets = [0, 0], sizes = [2, 32], strides = [1, 1]} : vector<2x128xf32> to vector<2x32xf32>
    %327 = vector.extract_strided_slice %324 {offsets = [0, 32], sizes = [2, 32], strides = [1, 1]} : vector<2x128xf32> to vector<2x32xf32>
    %328 = vector.extract_strided_slice %325 {offsets = [0, 64], sizes = [2, 32], strides = [1, 1]} : vector<2x128xf32> to vector<2x32xf32>
    %329 = vector.extract_strided_slice %324 {offsets = [0, 96], sizes = [2, 32], strides = [1, 1]} : vector<2x128xf32> to vector<2x32xf32>
    %330 = arith.mulf %327, %314 : vector<2x32xf32>
    %331 = arith.mulf %326, %328 : vector<2x32xf32>
    %332 = arith.addf %330, %331 : vector<2x32xf32>
    %333 = math.tanh %332 : vector<2x32xf32>
    %334 = arith.mulf %329, %333 : vector<2x32xf32>
    %335 = arith.select %12, %208, %334 : vector<2x32xi1>, vector<2x32xf32>
    %336 = arith.select %12, %226, %316 : vector<2x32xi1>, vector<2x32xf32>
    %337 = arith.select %12, %244, %298 : vector<2x32xi1>, vector<2x32xf32>
    %338 = arith.select %12, %262, %280 : vector<2x32xi1>, vector<2x32xf32>
    %339 = arith.select %12, %280, %262 : vector<2x32xi1>, vector<2x32xf32>
    %340 = arith.select %12, %298, %244 : vector<2x32xi1>, vector<2x32xf32>
    %341 = arith.select %12, %316, %226 : vector<2x32xi1>, vector<2x32xf32>
    %342 = arith.select %12, %334, %208 : vector<2x32xi1>, vector<2x32xf32>
    %343 = vector.shape_cast %335 : vector<2x32xf32> to vector<2x1x32xf32>
    %344 = vector.shape_cast %336 : vector<2x32xf32> to vector<2x1x32xf32>
    %345 = vector.shape_cast %337 : vector<2x32xf32> to vector<2x1x32xf32>
    %346 = vector.shape_cast %338 : vector<2x32xf32> to vector<2x1x32xf32>
    %347 = vector.shape_cast %339 : vector<2x32xf32> to vector<2x1x32xf32>
    %348 = vector.shape_cast %340 : vector<2x32xf32> to vector<2x1x32xf32>
    %349 = vector.shape_cast %341 : vector<2x32xf32> to vector<2x1x32xf32>
    %350 = vector.shape_cast %342 : vector<2x32xf32> to vector<2x1x32xf32>
    %351 = tpu.concatenate %343, %344, %345, %346, %347, %348, %349, %350 in 1 : vector<2x1x32xf32>, vector<2x1x32xf32>, vector<2x1x32xf32>, vector<2x1x32xf32>, vector<2x1x32xf32>, vector<2x1x32xf32>, vector<2x1x32xf32>, vector<2x1x32xf32> -> vector<2x8x32xf32>
    %352 = tpu.concatenate %342, %173 in 1 : vector<2x32xf32>, vector<2x32xf32> -> vector<2x64xf32>
    %cst_40 = arith.constant dense<0.000000e+00> : vector<2x128xf32>
    %353 = tpu.matmul %352, %3, %cst_40 {dimension_numbers = #tpu.dot_dimension_numbers<[1], [0], [0], [1], [0, 0, 1, 1], [], []>} : vector<2x64xf32>, vector<64x128xf32>, vector<2x128xf32> -> vector<2x128xf32>
    %354 = vector.extract_strided_slice %353 {offsets = [0, 0], sizes = [2, 32], strides = [1, 1]} : vector<2x128xf32> to vector<2x32xf32>
    %355 = vector.extract_strided_slice %353 {offsets = [0, 32], sizes = [2, 32], strides = [1, 1]} : vector<2x128xf32> to vector<2x32xf32>
    %356 = vector.shape_cast %354 : vector<2x32xf32> to vector<2x1x32xf32>
    %357 = vector.broadcast %356 : vector<2x1x32xf32> to vector<2x8x32xf32>
    %358 = arith.mulf %182, %357 : vector<2x8x32xf32>
    %cst_41 = arith.constant dense<0.000000e+00> : vector<2x8xf32>
    %359 = vector.multi_reduction <add>, %358, %cst_41 [2] : vector<2x8x32xf32> to vector<2x8xf32>
    %cst_42 = arith.constant dense<0xFF800000> : vector<2xf32>
    %360 = vector.multi_reduction <maximumf>, %359, %cst_42 [1] : vector<2x8xf32> to vector<2xf32>
    %361 = vector.shape_cast %360 : vector<2xf32> to vector<2x1xf32>
    %362 = vector.broadcast %361 : vector<2x1xf32> to vector<2x8xf32>
    %363 = arith.subf %359, %362 : vector<2x8xf32>
    %364 = math.exp %363 : vector<2x8xf32>
    %cst_43 = arith.constant dense<0.000000e+00> : vector<2xf32>
    %365 = vector.multi_reduction <add>, %364, %cst_43 [1] : vector<2x8xf32> to vector<2xf32>
    %366 = vector.shape_cast %365 : vector<2xf32> to vector<2x1xf32>
    %367 = vector.broadcast %366 : vector<2x1xf32> to vector<2x8xf32>
    %368 = arith.divf %364, %367 : vector<2x8xf32>
    %369 = vector.shape_cast %368 : vector<2x8xf32> to vector<2x8x1xf32>
    %370 = vector.broadcast %369 : vector<2x8x1xf32> to vector<2x8x32xf32>
    %371 = arith.mulf %370, %182 : vector<2x8x32xf32>
    %cst_44 = arith.constant dense<0.000000e+00> : vector<2x32xf32>
    %372 = vector.multi_reduction <add>, %371, %cst_44 [1] : vector<2x8x32xf32> to vector<2x32xf32>
    %373 = vector.shape_cast %355 : vector<2x32xf32> to vector<2x1x32xf32>
    %374 = vector.broadcast %373 : vector<2x1x32xf32> to vector<2x8x32xf32>
    %375 = arith.mulf %351, %374 : vector<2x8x32xf32>
    %cst_45 = arith.constant dense<0.000000e+00> : vector<2x8xf32>
    %376 = vector.multi_reduction <add>, %375, %cst_45 [2] : vector<2x8x32xf32> to vector<2x8xf32>
    %cst_46 = arith.constant dense<0xFF800000> : vector<2xf32>
    %377 = vector.multi_reduction <maximumf>, %376, %cst_46 [1] : vector<2x8xf32> to vector<2xf32>
    %378 = vector.shape_cast %377 : vector<2xf32> to vector<2x1xf32>
    %379 = vector.broadcast %378 : vector<2x1xf32> to vector<2x8xf32>
    %380 = arith.subf %376, %379 : vector<2x8xf32>
    %381 = math.exp %380 : vector<2x8xf32>
    %cst_47 = arith.constant dense<0.000000e+00> : vector<2xf32>
    %382 = vector.multi_reduction <add>, %381, %cst_47 [1] : vector<2x8xf32> to vector<2xf32>
    %383 = vector.shape_cast %382 : vector<2xf32> to vector<2x1xf32>
    %384 = vector.broadcast %383 : vector<2x1xf32> to vector<2x8xf32>
    %385 = arith.divf %381, %384 : vector<2x8xf32>
    %386 = vector.shape_cast %385 : vector<2x8xf32> to vector<2x8x1xf32>
    %387 = vector.broadcast %386 : vector<2x8x1xf32> to vector<2x8x32xf32>
    %388 = arith.mulf %387, %351 : vector<2x8x32xf32>
    %cst_48 = arith.constant dense<0.000000e+00> : vector<2x32xf32>
    %389 = vector.multi_reduction <add>, %388, %cst_48 [1] : vector<2x8x32xf32> to vector<2x32xf32>
    %390 = tpu.concatenate %372, %342, %389, %173 in 1 : vector<2x32xf32>, vector<2x32xf32>, vector<2x32xf32>, vector<2x32xf32> -> vector<2x128xf32>
    %cst_49 = arith.constant dense<0.000000e+00> : vector<2x128xf32>
    %391 = tpu.matmul %390, %4, %cst_49 {dimension_numbers = #tpu.dot_dimension_numbers<[1], [0], [0], [1], [0, 0, 1, 1], [], []>} : vector<2x128xf32>, vector<128x128xf32>, vector<2x128xf32> -> vector<2x128xf32>
    %392 = math.tanh %391 : vector<2x128xf32>
    %393 = vector.extract_strided_slice %392 {offsets = [0, 0], sizes = [2, 32], strides = [1, 1]} : vector<2x128xf32> to vector<2x32xf32>
    %394 = vector.extract_strided_slice %392 {offsets = [0, 32], sizes = [2, 32], strides = [1, 1]} : vector<2x128xf32> to vector<2x32xf32>
    %395 = arith.subf %393, %394 : vector<2x32xf32>
    %cst_50 = arith.constant 9.99999997E-7 : f32
    %396 = vector.broadcast %cst_50 : f32 to vector<2x32xf32>
    %397 = arith.addf %395, %396 : vector<2x32xf32>
    %398 = arith.mulf %397, %397 : vector<2x32xf32>
    %cst_51 = arith.constant dense<0.000000e+00> : vector<2xf32>
    %399 = vector.multi_reduction <add>, %398, %cst_51 [1] : vector<2x32xf32> to vector<2xf32>
    %400 = math.sqrt %399 : vector<2xf32>
    %401 = vector.shape_cast %400 : vector<2xf32> to vector<2x1xf32>
    %cst_52 = arith.constant 0.000000e+00 : f32
    %402 = vector.broadcast %cst_52 : f32 to vector<2x63xf32>
    %403 = tpu.concatenate %173, %342, %401, %402 in 1 : vector<2x32xf32>, vector<2x32xf32>, vector<2x1xf32>, vector<2x63xf32> -> vector<2x128xf32>
    %cst_53 = arith.constant 0.000000e+00 : f32
    %404 = vector.broadcast %cst_53 : f32 to vector<6x128xf32>
    %405 = tpu.concatenate %403, %404 in 0 : vector<2x128xf32>, vector<6x128xf32> -> vector<8x128xf32>
    %c0_54 = arith.constant 0 : index
    %c0_55 = arith.constant 0 : index
    %406 = vector.load %arg2[%c0_54, %c0_55] : memref<8x128xf32, #tpu.memory_space<vmem>>, vector<8x128xf32>
    tpu.vector_store %arg2[%c0_54, %c0_55], %405 {strides = array<i32>} : memref<8x128xf32, #tpu.memory_space<vmem>>, vector<8x128xf32>,
    return
  }
}

</mosaic_0001>

<llo_original>
// kernel: siamese_forward.1
$region0: #{siamese_forward.1}
  #allocation0 [shape = 'u32[]', space=smem, size = 0x4, offset = 0x4, fixed_abs, tag = 'smem constant byte address 0x4 - core index']
  #allocation1 [shape = 'u32[72,128]{1,0:T(1,128)}', space=vmem, size = 0x9000, scoped, tag = 'internal scratch']
  %s0 = inlined_call_operand.vmem [shape: f32[360,128], index: 0, kind: input, shape index: {}]
  %s1 = inlined_call_operand.vmem [shape: f32[32,128], index: 1, kind: input, shape index: {}]
  %s2 = inlined_call_operand.vmem [shape: f32[8,128], index: 2, kind: output, shape index: {}]
  %s3 = sld [smem:[#allocation0]]
  $region18: #{siamese_forward.1} parent=0
    _
  %s5 = ssub.s32 1, %s3
  %s6 = scalar_select 0, %s5, %s3
  // Predicated region
  $region2: #{siamese_forward.1} parent=0 // pred_check
    _
  $region3: #{siamese_forward.1} parent=0 // pred_check_branch
    %8 = sbr.rel (0) target = $region5
  $region4: #{siamese_forward.1} parent=0 // pred_region
    _
  $region5: #{siamese_forward.1} parent=0 // pred_fallthru
    _
  // Predicated region
  $region6: #{siamese_forward.1} parent=0 // pred_check
    _
  $region7: #{siamese_forward.1} parent=0 // pred_check_branch
    %10 = sbr.rel (0) target = $region9
  $region8: #{siamese_forward.1} parent=0 // pred_region
    _
  $region9: #{siamese_forward.1} parent=0 // pred_fallthru
    _
  %v12 = vld [vmem:[%s0] sm:$0xff]
  %v13 = vld [vmem:[%s0 + $0x8] sm:$0xff]
  %v14 = vld [vmem:[%s0 + $0x10] sm:$0xff]
  %v15 = vld [vmem:[%s0 + $0x18] sm:$0xff]
  %v16 = vld [vmem:[%s0 + $0x20] sm:$0xff]
  %v17 = vld [vmem:[%s0 + $0x28] sm:$0xff]
  %v18 = vld [vmem:[%s0 + $0x30] sm:$0xff]
  %v19 = vld [vmem:[%s0 + $0x38] sm:$0xff]
  %v20 = vld [vmem:[%s0 + $0x40] sm:$0xff]
  %v21 = vld [vmem:[%s0 + $0x48] sm:$0xff]
  %v22 = vld [vmem:[%s0 + $0x50] sm:$0xff]
  %v23 = vld [vmem:[%s0 + $0x58] sm:$0xff]
  %v24 = vld [vmem:[%s0 + $0x60] sm:$0xff]
  %v25 = vld [vmem:[%s0 + $0x68] sm:$0xff]
  %v26 = vld [vmem:[%s0 + $0x70] sm:$0xff]
  %v27 = vld [vmem:[%s0 + $0x78] sm:$0xff]
  %v28 = vld [vmem:[%s0 + $0x80] sm:$0xff]
  %v29 = vld [vmem:[%s0 + $0x88] sm:$0xff]
  %v30 = vld [vmem:[%s0 + $0x90] sm:$0xff]
  %v31 = vld [vmem:[%s0 + $0x98] sm:$0xff]
  %v32 = vld [vmem:[%s0 + $0xa0] sm:$0x1]
  %v33 = vld [vmem:[%s0 + $0xa8] sm:$0xff]
  %v34 = vld [vmem:[%s0 + $0xb0] sm:$0xff]
  %v35 = vld [vmem:[%s0 + $0xb8] sm:$0xff]
  %v36 = vld [vmem:[%s0 + $0xc0] sm:$0xff]
  %v37 = vld [vmem:[%s0 + $0xc8] sm:$0xff]
  %v38 = vld [vmem:[%s0 + $0xd0] sm:$0xff]
  %v39 = vld [vmem:[%s0 + $0xd8] sm:$0xff]
  %v40 = vld [vmem:[%s0 + $0xe0] sm:$0xff]
  %v41 = vld [vmem:[%s0 + $0xe8] sm:$0xff]
  %v42 = vld [vmem:[%s0 + $0xf0] sm:$0xff]
  %v43 = vld [vmem:[%s0 + $0xf8] sm:$0xff]
  %v44 = vld [vmem:[%s0 + $0x100] sm:$0xff]
  %v45 = vld [vmem:[%s0 + $0x108] sm:$0xff]
  %v46 = vld [vmem:[%s0 + $0x110] sm:$0xff]
  %v47 = vld [vmem:[%s0 + $0x118] sm:$0xff]
  %v48 = vld [vmem:[%s0 + $0x120] sm:$0xff]
  %v49 = vld [vmem:[%s0 + $0x128] sm:$0xff]
  %v50 = vld [vmem:[%s0 + $0x130] sm:$0xff]
  %v51 = vld [vmem:[%s0 + $0x138] sm:$0xff]
  %v52 = vld [vmem:[%s0 + $0x140] sm:$0xff]
  %v53 = vld [vmem:[%s0 + $0x148] sm:$0xff]
  %v54 = vld [vmem:[%s0 + $0x150] sm:$0xff]
  %v55 = vld [vmem:[%s0 + $0x158] sm:$0xff]
  %v56 = vld [vmem:[%s0 + $0x160] sm:$0xff]
  %v57 = vpack.c.bf16 %v29, %v28
  %v58 = vpack.c.bf16 %v31, %v30
  %v59 = vld [vmem:[%s1] sm:$0xff]
  %v60 = vld [vmem:[%s1 + $0x8] sm:$0xff]
  %v61 = vld [vmem:[%s1 + $0x10] sm:$0xff]
  %v62 = vld [vmem:[%s1 + $0x18] sm:$0xff]
  %v63 = vperm.slane %v32, 0
  %64 = vmatpush.msra.mxu0 %v27
  %65 = vmatpush.msra.mxu0 %v26
  %66 = vmatpush.msra.mxu0 %v25
  %67 = vmatpush.msra.mxu0 %v24
  %68 = vmatpush.msra.mxu0 %v23
  %69 = vmatpush.msra.mxu0 %v22
  %70 = vmatpush.msra.mxu0 %v21
  %71 = vmatpush.msra.mxu0 %v20
  %72 = vmatpush.msra.mxu0 %v19
  %73 = vmatpush.msra.mxu0 %v18
  %74 = vmatpush.msra.mxu0 %v17
  %75 = vmatpush.msra.mxu0 %v16
  %76 = vmatpush.msra.mxu0 %v15
  %77 = vmatpush.msra.mxu0 %v14
  %78 = vmatpush.msra.mxu0 %v13
  %79 = vmatpush.msra.mxu0 %v12
  %80 = vmatmul.f32.gmra.mxu0 %v59
  %v81 = vpop.f32.mrf.mxu0
  %v82 = vadd.f32 %v63, %v81
  %83 = vmatmul.f32.gmra.mxu0 %v60
  %v84 = vpop.f32.mrf.mxu0
  %v85 = vadd.f32 %v63, %v84
  %86 = vmatmul.f32.gmra.mxu0 %v61
  %v87 = vpop.f32.mrf.mxu0
  %v88 = vadd.f32 %v63, %v87
  %89 = vmatmul.f32.gmra.mxu0 %v62
  %v90 = vpop.f32.mrf.mxu0
  %v91 = vadd.f32 %v63, %v90
  %92 = vdwg.mxu0
  %v93 = vlaneseq
  %v94 = vand.u32 %v93, 127
  %vm95 = vcmp.lt.s32.totalorder %v94, 16
  %vm96 = vcmask 261120
  %v98 = vsel %vm96, 0, 0
  %100 = vmatpush.bf16.msra.mxu0 0
  %101 = vmatpush.bf16.msra.mxu0 0
  %102 = vmatpush.bf16.msra.mxu0 0
  %103 = vmatpush.bf16.msra.mxu0 0
  %104 = vmatpush.bf16.msra.mxu0 0
  %105 = vmatpush.bf16.msra.mxu0 0
  %106 = vmatpush.bf16.msra.mxu0 %v58
  %107 = vmatpush.bf16.msra.mxu0 %v57
  %108 = vmatmul.bf16.gmra.mxu0 %v98
  %v109 = vpop.f32.mrf.mxu0
  %v110 = vadd.f32 0.0, %v109
  %v111 = vpop.f32.mrf.mxu0
  %112 = vdwg.mxu0
  %v113 = vadd.f32 %v82, %v110
  %v114 = vxor.u32 %v113, 2147483648
  %v115 = vmul.f32 %v114, 1.442695
  %v116 = vpow.pop %v115
  %v117 = vadd.f32 %v116, 1.0
  %v118 = vrcp.pop %v117
  %v119 = vmul.f32 %v117, %v118
  %v120 = vsub.f32 1.0, %v119
  %v121 = vmul.f32 %v118, %v120
  %v122 = vadd.f32 %v118, %v121
  %vm123 = vweird.f32 %v117
  %vm124 = vweird.f32 %v118
  %vm125 = vmor %vm123, %vm124
  %v126 = vsel %vm125, %v118, %v122
  %v127 = vand.u32 2147483647, %v117
  %vm128 = vcmp.eq.f32.partialorder %v127, 8.507059e+37
  %v129 = vand.u32 %v117, 2147483648
  %v130 = vor.u32 1.1754944e-38, %v129
  %v131 = vsel %vm128, %v130, %v126
  %v132 = vmul.f32 1.0, %v131
  %v133 = vtanh.pop %v113
  %v134 = vmul.f32 %v132, 0.0
  %136 = vrot.lane.b32.xlu0 %v133, 64
  %v137 = vpop.permute.xlu0 %136
  %v139 = vmul.f32 %v132, %v137
  %141 = vrot.lane.b32.xlu0 %v139, 32
  %v142 = vpop.permute.xlu0 %141
  %v144 = vadd.f32 %v134, %v142
  %v145 = vtanh.pop %v144
  %147 = vrot.lane.b32.xlu0 %v145, 64
  %v148 = vpop.permute.xlu0 %147
  %v150 = vmul.f32 %v132, %v148
  %v151 = vpack.c.bf16 %v150, %v150
  %153 = vrot.lane.b32.xlu0 %v151, 32
  %v154 = vpop.permute.xlu0 %153
  %v156 = vsel %vm96, %v154, 0
  %158 = vmatpush.bf16.msra.mxu0 0
  %159 = vmatpush.bf16.msra.mxu0 0
  %160 = vmatpush.bf16.msra.mxu0 0
  %161 = vmatpush.bf16.msra.mxu0 0
  %162 = vmatpush.bf16.msra.mxu0 0
  %163 = vmatpush.bf16.msra.mxu0 0
  %164 = vmatpush.bf16.msra.mxu0 %v58
  %165 = vmatpush.bf16.msra.mxu0 %v57
  %166 = vmatmul.bf16.gmra.mxu0 %v156
  %v167 = vpop.f32.mrf.mxu0
  %v168 = vadd.f32 0.0, %v167
  %v169 = vpop.f32.mrf.mxu0
  %170 = vdwg.mxu0
  %v172 = vrot.slane %v168, 6
  %v174 = vadd.f32 %v82, %v172
  %v175 = vxor.u32 %v174, 2147483648
  %v176 = vmul.f32 %v175, 1.442695
  %v177 = vpow.pop %v176
  %v178 = vadd.f32 %v177, 1.0
  %v179 = vrcp.pop %v178
  %v180 = vmul.f32 %v178, %v179
  %v181 = vsub.f32 1.0, %v180
  %v182 = vmul.f32 %v179, %v181
  %v183 = vadd.f32 %v179, %v182
  %vm184 = vweird.f32 %v178
  %vm185 = vweird.f32 %v179
  %vm186 = vmor %vm184, %vm185
  %v187 = vsel %vm186, %v179, %v183
  %v188 = vand.u32 2147483647, %v178
  %vm189 = vcmp.eq.f32.partialorder %v188, 8.507059e+37
  %v190 = vand.u32 %v178, 2147483648
  %v191 = vor.u32 1.1754944e-38, %v190
  %v192 = vsel %vm189, %v191, %v187
  %v193 = vmul.f32 1.0, %v192
  %v194 = vtanh.pop %v174
  %v196 = vrot.slane %v144, 6
  %v198 = vmul.f32 %v193, %v196
  %200 = vrot.lane.b32.xlu0 %v194, 64
  %v201 = vpop.permute.xlu0 %200
  %v203 = vmul.f32 %v193, %v201
  %205 = vrot.lane.b32.xlu0 %v203, 32
  %v206 = vpop.permute.xlu0 %205
  %v208 = vadd.f32 %v198, %v206
  %v209 = vtanh.pop %v208
  %211 = vrot.lane.b32.xlu0 %v209, 64
  %v212 = vpop.permute.xlu0 %211
  %v214 = vmul.f32 %v193, %v212
  %v215 = vpack.c.bf16 %v214, %v214
  %v217 = vrot.slane %v215, 1
  %218 = vrot.lane.b32.xlu0 %v217, 32
  %v219 = vpop.permute.xlu0 %218
  %v221 = vsel %vm96, %v219, 0
  %223 = vmatpush.bf16.msra.mxu0 0
  %224 = vmatpush.bf16.msra.mxu0 0
  %225 = vmatpush.bf16.msra.mxu0 0
  %226 = vmatpush.bf16.msra.mxu0 0
  %227 = vmatpush.bf16.msra.mxu0 0
  %228 = vmatpush.bf16.msra.mxu0 0
  %229 = vmatpush.bf16.msra.mxu0 %v58
  %230 = vmatpush.bf16.msra.mxu0 %v57
  %231 = vmatmul.bf16.gmra.mxu0 %v221
  %v232 = vpop.f32.mrf.mxu0
  %v233 = vadd.f32 0.0, %v232
  %v234 = vpop.f32.mrf.mxu0
  %235 = vdwg.mxu0
  %v237 = vrot.slane %v233, 4
  %v239 = vadd.f32 %v82, %v237
  %v240 = vxor.u32 %v239, 2147483648
  %v241 = vmul.f32 %v240, 1.442695
  %v242 = vpow.pop %v241
  %v243 = vadd.f32 %v242, 1.0
  %v244 = vrcp.pop %v243
  %v245 = vmul.f32 %v243, %v244
  %v246 = vsub.f32 1.0, %v245
  %v247 = vmul.f32 %v244, %v246
  %v248 = vadd.f32 %v244, %v247
  %vm249 = vweird.f32 %v243
  %vm250 = vweird.f32 %v244
  %vm251 = vmor %vm249, %vm250
  %v252 = vsel %vm251, %v244, %v248
  %v253 = vand.u32 2147483647, %v243
  %vm254 = vcmp.eq.f32.partialorder %v253, 8.507059e+37
  %v255 = vand.u32 %v243, 2147483648
  %v256 = vor.u32 1.1754944e-38, %v255
  %v257 = vsel %vm254, %v256, %v252
  %v258 = vmul.f32 1.0, %v257
  %v259 = vtanh.pop %v239
  %v261 = vrot.slane %v208, 6
  %v263 = vmul.f32 %v258, %v261
  %265 = vrot.lane.b32.xlu0 %v259, 64
  %v266 = vpop.permute.xlu0 %265
  %v268 = vmul.f32 %v258, %v266
  %270 = vrot.lane.b32.xlu0 %v268, 32
  %v271 = vpop.permute.xlu0 %270
  %v273 = vadd.f32 %v263, %v271
  %v274 = vtanh.pop %v273
  %276 = vrot.lane.b32.xlu0 %v274, 64
  %v277 = vpop.permute.xlu0 %276
  %v279 = vmul.f32 %v258, %v277
  %v280 = vpack.c.bf16 %v279, %v279
  %v282 = vrot.slane %v280, 2
  %283 = vrot.lane.b32.xlu0 %v282, 32
  %v284 = vpop.permute.xlu0 %283
  %v286 = vsel %vm96, %v284, 0
  %288 = vmatpush.bf16.msra.mxu0 0
  %289 = vmatpush.bf16.msra.mxu0 0
  %290 = vmatpush.bf16.msra.mxu0 0
  %291 = vmatpush.bf16.msra.mxu0 0
  %292 = vmatpush.bf16.msra.mxu0 0
  %293 = vmatpush.bf16.msra.mxu0 0
  %294 = vmatpush.bf16.msra.mxu0 %v58
  %295 = vmatpush.bf16.msra.mxu0 %v57
  %296 = vmatmul.bf16.gmra.mxu0 %v286
  %v297 = vpop.f32.mrf.mxu0
  %v298 = vadd.f32 0.0, %v297
  %v299 = vpop.f32.mrf.mxu0
  %300 = vdwg.mxu0
  %v302 = vrot.slane %v298, 2
  %v304 = vadd.f32 %v82, %v302
  %v305 = vxor.u32 %v304, 2147483648
  %v306 = vmul.f32 %v305, 1.442695
  %v307 = vpow.pop %v306
  %v308 = vadd.f32 %v307, 1.0
  %v309 = vrcp.pop %v308
  %v310 = vmul.f32 %v308, %v309
  %v311 = vsub.f32 1.0, %v310
  %v312 = vmul.f32 %v309, %v311
  %v313 = vadd.f32 %v309, %v312
  %vm314 = vweird.f32 %v308
  %vm315 = vweird.f32 %v309
  %vm316 = vmor %vm314, %vm315
  %v317 = vsel %vm316, %v309, %v313
  %v318 = vand.u32 2147483647, %v308
  %vm319 = vcmp.eq.f32.partialorder %v318, 8.507059e+37
  %v320 = vand.u32 %v308, 2147483648
  %v321 = vor.u32 1.1754944e-38, %v320
  %v322 = vsel %vm319, %v321, %v317
  %v323 = vmul.f32 1.0, %v322
  %v324 = vtanh.pop %v304
  %v326 = vrot.slane %v273, 6
  %v328 = vmul.f32 %v323, %v326
  %330 = vrot.lane.b32.xlu0 %v324, 64
  %v331 = vpop.permute.xlu0 %330
  %v333 = vmul.f32 %v323, %v331
  %335 = vrot.lane.b32.xlu0 %v333, 32
  %v336 = vpop.permute.xlu0 %335
  %v338 = vadd.f32 %v328, %v336
  %v339 = vtanh.pop %v338
  %341 = vrot.lane.b32.xlu0 %v339, 64
  %v342 = vpop.permute.xlu0 %341
  %v344 = vmul.f32 %v323, %v342
  %v345 = vpack.c.bf16 %v344, %v344
  %v347 = vrot.slane %v345, 3
  %348 = vrot.lane.b32.xlu0 %v347, 32
  %v349 = vpop.permute.xlu0 %348
  %v351 = vsel %vm96, %v349, 0
  %353 = vmatpush.bf16.msra.mxu0 0
  %354 = vmatpush.bf16.msra.mxu0 0
  %355 = vmatpush.bf16.msra.mxu0 0
  %356 = vmatpush.bf16.msra.mxu0 0
  %357 = vmatpush.bf16.msra.mxu0 0
  %358 = vmatpush.bf16.msra.mxu0 0
  %359 = vmatpush.bf16.msra.mxu0 %v58
  %360 = vmatpush.bf16.msra.mxu0 %v57
  %361 = vmatmul.bf16.gmra.mxu0 %v351
  %v362 = vpop.f32.mrf.mxu0
  %v363 = vadd.f32 0.0, %v362
  %v364 = vpop.f32.mrf.mxu0
  %365 = vdwg.mxu0
  %v366 = vadd.f32 %v85, %v363
  %v367 = vxor.u32 %v366, 2147483648
  %v368 = vmul.f32 %v367, 1.442695
  %v369 = vpow.pop %v368
  %v370 = vadd.f32 %v369, 1.0
  %v371 = vrcp.pop %v370
  %v372 = vmul.f32 %v370, %v371
  %v373 = vsub.f32 1.0, %v372
  %v374 = vmul.f32 %v371, %v373
  %v375 = vadd.f32 %v371, %v374
  %vm376 = vweird.f32 %v370
  %vm377 = vweird.f32 %v371
  %vm378 = vmor %vm376, %vm377
  %v379 = vsel %vm378, %v371, %v375
  %v380 = vand.u32 2147483647, %v370
  %vm381 = vcmp.eq.f32.partialorder %v380, 8.507059e+37
  %v382 = vand.u32 %v370, 2147483648
  %v383 = vor.u32 1.1754944e-38, %v382
  %v384 = vsel %vm381, %v383, %v379
  %v385 = vmul.f32 1.0, %v384
  %v386 = vtanh.pop %v366
  %v388 = vrot.slane %v338, 6
  %v390 = vmul.f32 %v385, %v388
  %392 = vrot.lane.b32.xlu0 %v386, 64
  %v393 = vpop.permute.xlu0 %392
  %v395 = vmul.f32 %v385, %v393
  %397 = vrot.lane.b32.xlu0 %v395, 32
  %v398 = vpop.permute.xlu0 %397
  %v400 = vadd.f32 %v390, %v398
  %v401 = vtanh.pop %v400
  %403 = vrot.lane.b32.xlu0 %v401, 64
  %v404 = vpop.permute.xlu0 %403
  %v406 = vmul.f32 %v385, %v404
  %v407 = vpack.c.bf16 %v406, %v406
  %409 = vrot.lane.b32.xlu0 %v407, 32
  %v410 = vpop.permute.xlu0 %409
  %v412 = vsel %vm96, %v410, 0
  %414 = vmatpush.bf16.msra.mxu0 0
  %415 = vmatpush.bf16.msra.mxu0 0
  %416 = vmatpush.bf16.msra.mxu0 0
  %417 = vmatpush.bf16.msra.mxu0 0
  %418 = vmatpush.bf16.msra.mxu0 0
  %419 = vmatpush.bf16.msra.mxu0 0
  %420 = vmatpush.bf16.msra.mxu0 %v58
  %421 = vmatpush.bf16.msra.mxu0 %v57
  %422 = vmatmul.bf16.gmra.mxu0 %v412
  %v423 = vpop.f32.mrf.mxu0
  %v424 = vadd.f32 0.0, %v423
  %v425 = vpop.f32.mrf.mxu0
  %426 = vdwg.mxu0
  %v428 = vrot.slane %v424, 6
  %v430 = vadd.f32 %v85, %v428
  %v431 = vxor.u32 %v430, 2147483648
  %v432 = vmul.f32 %v431, 1.442695
  %v433 = vpow.pop %v432
  %v434 = vadd.f32 %v433, 1.0
  %v435 = vrcp.pop %v434
  %v436 = vmul.f32 %v434, %v435
  %v437 = vsub.f32 1.0, %v436
  %v438 = vmul.f32 %v435, %v437
  %v439 = vadd.f32 %v435, %v438
  %vm440 = vweird.f32 %v434
  %vm441 = vweird.f32 %v435
  %vm442 = vmor %vm440, %vm441
  %v443 = vsel %vm442, %v435, %v439
  %v444 = vand.u32 2147483647, %v434
  %vm445 = vcmp.eq.f32.partialorder %v444, 8.507059e+37
  %v446 = vand.u32 %v434, 2147483648
  %v447 = vor.u32 1.1754944e-38, %v446
  %v448 = vsel %vm445, %v447, %v443
  %v449 = vmul.f32 1.0, %v448
  %v450 = vtanh.pop %v430
  %v452 = vrot.slane %v400, 6
  %v454 = vmul.f32 %v449, %v452
  %456 = vrot.lane.b32.xlu0 %v450, 64
  %v457 = vpop.permute.xlu0 %456
  %v459 = vmul.f32 %v449, %v457
  %461 = vrot.lane.b32.xlu0 %v459, 32
  %v462 = vpop.permute.xlu0 %461
  %v464 = vadd.f32 %v454, %v462
  %v465 = vtanh.pop %v464
  %467 = vrot.lane.b32.xlu0 %v465, 64
  %v468 = vpop.permute.xlu0 %467
  %v470 = vmul.f32 %v449, %v468
  %v471 = vpack.c.bf16 %v470, %v470
  %v473 = vrot.slane %v471, 1
  %474 = vrot.lane.b32.xlu0 %v473, 32
  %v475 = vpop.permute.xlu0 %474
  %v477 = vsel %vm96, %v475, 0
  %479 = vmatpush.bf16.msra.mxu0 0
  %480 = vmatpush.bf16.msra.mxu0 0
  %481 = vmatpush.bf16.msra.mxu0 0
  %482 = vmatpush.bf16.msra.mxu0 0
  %483 = vmatpush.bf16.msra.mxu0 0
  %484 = vmatpush.bf16.msra.mxu0 0
  %485 = vmatpush.bf16.msra.mxu0 %v58
  %486 = vmatpush.bf16.msra.mxu0 %v57
  %487 = vmatmul.bf16.gmra.mxu0 %v477
  %v488 = vpop.f32.mrf.mxu0
  %v489 = vadd.f32 0.0, %v488
  %v490 = vpop.f32.mrf.mxu0
  %491 = vdwg.mxu0
  %v493 = vrot.slane %v489, 4
  %v495 = vadd.f32 %v85, %v493
  %v496 = vxor.u32 %v495, 2147483648
  %v497 = vmul.f32 %v496, 1.442695
  %v498 = vpow.pop %v497
  %v499 = vadd.f32 %v498, 1.0
  %v500 = vrcp.pop %v499
  %v501 = vmul.f32 %v499, %v500
  %v502 = vsub.f32 1.0, %v501
  %v503 = vmul.f32 %v500, %v502
  %v504 = vadd.f32 %v500, %v503
  %vm505 = vweird.f32 %v499
  %vm506 = vweird.f32 %v500
  %vm507 = vmor %vm505, %vm506
  %v508 = vsel %vm507, %v500, %v504
  %v509 = vand.u32 2147483647, %v499
  %vm510 = vcmp.eq.f32.partialorder %v509, 8.507059e+37
  %v511 = vand.u32 %v499, 2147483648
  %v512 = vor.u32 1.1754944e-38, %v511
  %v513 = vsel %vm510, %v512, %v508
  %v514 = vmul.f32 1.0, %v513
  %v515 = vtanh.pop %v495
  %v517 = vrot.slane %v464, 6
  %v519 = vmul.f32 %v514, %v517
  %521 = vrot.lane.b32.xlu0 %v515, 64
  %v522 = vpop.permute.xlu0 %521
  %v524 = vmul.f32 %v514, %v522
  %526 = vrot.lane.b32.xlu0 %v524, 32
  %v527 = vpop.permute.xlu0 %526
  %v529 = vadd.f32 %v519, %v527
  %v530 = vtanh.pop %v529
  %532 = vrot.lane.b32.xlu0 %v530, 64
  %v533 = vpop.permute.xlu0 %532
  %v535 = vmul.f32 %v514, %v533
  %v536 = vpack.c.bf16 %v535, %v535
  %v538 = vrot.slane %v536, 2
  %539 = vrot.lane.b32.xlu0 %v538, 32
  %v540 = vpop.permute.xlu0 %539
  %v542 = vsel %vm96, %v540, 0
  %544 = vmatpush.bf16.msra.mxu0 0
  %545 = vmatpush.bf16.msra.mxu0 0
  %546 = vmatpush.bf16.msra.mxu0 0
  %547 = vmatpush.bf16.msra.mxu0 0
  %548 = vmatpush.bf16.msra.mxu0 0
  %549 = vmatpush.bf16.msra.mxu0 0
  %550 = vmatpush.bf16.msra.mxu0 %v58
  %551 = vmatpush.bf16.msra.mxu0 %v57
  %552 = vmatmul.bf16.gmra.mxu0 %v542
  %v553 = vpop.f32.mrf.mxu0
  %v554 = vadd.f32 0.0, %v553
  %v555 = vpop.f32.mrf.mxu0
  %556 = vdwg.mxu0
  %v558 = vrot.slane %v554, 2
  %v560 = vadd.f32 %v85, %v558
  %v561 = vxor.u32 %v560, 2147483648
  %v562 = vmul.f32 %v561, 1.442695
  %v563 = vpow.pop %v562
  %v564 = vadd.f32 %v563, 1.0
  %v565 = vrcp.pop %v564
  %v566 = vmul.f32 %v564, %v565
  %v567 = vsub.f32 1.0, %v566
  %v568 = vmul.f32 %v565, %v567
  %v569 = vadd.f32 %v565, %v568
  %vm570 = vweird.f32 %v564
  %vm571 = vweird.f32 %v565
  %vm572 = vmor %vm570, %vm571
  %v573 = vsel %vm572, %v565, %v569
  %v574 = vand.u32 2147483647, %v564
  %vm575 = vcmp.eq.f32.partialorder %v574, 8.507059e+37
  %v576 = vand.u32 %v564, 2147483648
  %v577 = vor.u32 1.1754944e-38, %v576
  %v578 = vsel %vm575, %v577, %v573
  %v579 = vmul.f32 1.0, %v578
  %v580 = vtanh.pop %v560
  %v582 = vrot.slane %v529, 6
  %v584 = vmul.f32 %v579, %v582
  %586 = vrot.lane.b32.xlu0 %v580, 64
  %v587 = vpop.permute.xlu0 %586
  %v589 = vmul.f32 %v579, %v587
  %591 = vrot.lane.b32.xlu0 %v589, 32
  %v592 = vpop.permute.xlu0 %591
  %v594 = vadd.f32 %v584, %v592
  %v595 = vtanh.pop %v594
  %597 = vrot.lane.b32.xlu0 %v595, 64
  %v598 = vpop.permute.xlu0 %597
  %v600 = vmul.f32 %v579, %v598
  %602 = vrot.lane.b32.xlu0 %v150, 32
  %v603 = vpop.permute.xlu0 %602
  %v606 = vrot.slane %v600, 6
  %607 = vrot.lane.b32.xlu0 %v606, 32
  %v608 = vpop.permute.xlu0 %607
  %v610 = vsel %vm95, %v603, %v608
  %v612 = vrot.slane %v214, 2
  %613 = vrot.lane.b32.xlu0 %v612, 32
  %v614 = vpop.permute.xlu0 %613
  %v617 = vrot.slane %v535, 4
  %618 = vrot.lane.b32.xlu0 %v617, 32
  %v619 = vpop.permute.xlu0 %618
  %v621 = vsel %vm95, %v614, %v619
  %v623 = vrot.slane %v279, 4
  %624 = vrot.lane.b32.xlu0 %v623, 32
  %v625 = vpop.permute.xlu0 %624
  %v628 = vrot.slane %v470, 2
  %629 = vrot.lane.b32.xlu0 %v628, 32
  %v630 = vpop.permute.xlu0 %629
  %v632 = vsel %vm95, %v625, %v630
  %v634 = vrot.slane %v344, 6
  %635 = vrot.lane.b32.xlu0 %v634, 32
  %v636 = vpop.permute.xlu0 %635
  %639 = vrot.lane.b32.xlu0 %v406, 32
  %v640 = vpop.permute.xlu0 %639
  %v642 = vsel %vm95, %v636, %v640
  %v643 = vsel %vm95, %v640, %v636
  %v644 = vsel %vm95, %v630, %v625
  %v645 = vsel %vm95, %v619, %v614
  %v646 = vsel %vm95, %v608, %v603
  %v648 = vrot.slane %v610, 1
  %v651 = vrot.slane %v621, 1
  %v653 = vrot.slane %v632, 1
  %v655 = vrot.slane %v642, 1
  %v657 = vrot.slane %v643, 1
  %v659 = vrot.slane %v644, 1
  %v661 = vrot.slane %v645, 1
  %v663 = vrot.slane %v646, 1
  %v664 = vperm.slane %v621, 0
  %v665 = vperm.slane %v651, 0
  %v668 = vperm.slane %v632, 0
  %v669 = vperm.slane %v653, 0
  %v672 = vperm.slane %v642, 0
  %v673 = vperm.slane %v655, 0
  %v676 = vperm.slane %v643, 0
  %v677 = vperm.slane %v657, 0
  %v680 = vperm.slane %v644, 0
  %v681 = vperm.slane %v659, 0
  %v684 = vperm.slane %v645, 0
  %v685 = vperm.slane %v661, 0
  %v688 = vperm.slane %v646, 0
  %v689 = vperm.slane %v663, 0
  %vm692 = vcmask 1040384
  %v693 = vsel %vm692, %v610, %v664
  %v694 = vsel %vm692, %v648, %v665
  %vm695 = vcmask 1041408
  %v696 = vsel %vm695, %v693, %v668
  %v697 = vsel %vm695, %v694, %v669
  %vm698 = vcmask 1042432
  %v699 = vsel %vm698, %v696, %v672
  %v700 = vsel %vm698, %v697, %v673
  %vm701 = vcmask 1043456
  %v702 = vsel %vm701, %v699, %v676
  %v703 = vsel %vm701, %v700, %v677
  %vm704 = vcmask 1044480
  %v705 = vsel %vm704, %v702, %v680
  %v706 = vsel %vm704, %v703, %v681
  %vm707 = vcmask 1045504
  %v708 = vsel %vm707, %v705, %v684
  %v709 = vsel %vm707, %v706, %v685
  %vm710 = vcmask 1046528
  %v711 = vsel %vm710, %v708, %v688
  %v712 = vsel %vm710, %v709, %v689
  %v713 = vpack.c.bf16 %v600, %v600
  %v715 = vrot.slane %v713, 3
  %716 = vrot.lane.b32.xlu0 %v715, 32
  %v717 = vpop.permute.xlu0 %716
  %v719 = vsel %vm96, %v717, 0
  %721 = vmatpush.bf16.msra.mxu0 0
  %722 = vmatpush.bf16.msra.mxu0 0
  %723 = vmatpush.bf16.msra.mxu0 0
  %724 = vmatpush.bf16.msra.mxu0 0
  %725 = vmatpush.bf16.msra.mxu0 0
  %726 = vmatpush.bf16.msra.mxu0 0
  %727 = vmatpush.bf16.msra.mxu0 %v58
  %728 = vmatpush.bf16.msra.mxu0 %v57
  %729 = vmatmul.bf16.gmra.mxu0 %v719
  %v730 = vpop.f32.mrf.mxu0
  %v731 = vadd.f32 0.0, %v730
  %v732 = vpop.f32.mrf.mxu0
  %733 = vdwg.mxu0
  %v734 = vadd.f32 %v88, %v731
  %v735 = vxor.u32 %v734, 2147483648
  %v736 = vmul.f32 %v735, 1.442695
  %v737 = vpow.pop %v736
  %v738 = vadd.f32 %v737, 1.0
  %v739 = vrcp.pop %v738
  %v740 = vmul.f32 %v738, %v739
  %v741 = vsub.f32 1.0, %v740
  %v742 = vmul.f32 %v739, %v741
  %v743 = vadd.f32 %v739, %v742
  %vm744 = vweird.f32 %v738
  %vm745 = vweird.f32 %v739
  %vm746 = vmor %vm744, %vm745
  %v747 = vsel %vm746, %v739, %v743
  %v748 = vand.u32 2147483647, %v738
  %vm749 = vcmp.eq.f32.partialorder %v748, 8.507059e+37
  %v750 = vand.u32 %v738, 2147483648
  %v751 = vor.u32 1.1754944e-38, %v750
  %v752 = vsel %vm749, %v751, %v747
  %v753 = vmul.f32 1.0, %v752
  %v754 = vtanh.pop %v734
  %v756 = vrot.slane %v594, 6
  %v758 = vmul.f32 %v753, %v756
  %760 = vrot.lane.b32.xlu0 %v754, 64
  %v761 = vpop.permute.xlu0 %760
  %v763 = vmul.f32 %v753, %v761
  %765 = vrot.lane.b32.xlu0 %v763, 32
  %v766 = vpop.permute.xlu0 %765
  %v768 = vadd.f32 %v758, %v766
  %v769 = vtanh.pop %v768
  %771 = vrot.lane.b32.xlu0 %v769, 64
  %v772 = vpop.permute.xlu0 %771
  %v774 = vmul.f32 %v753, %v772
  %v775 = vpack.c.bf16 %v774, %v774
  %777 = vrot.lane.b32.xlu0 %v775, 32
  %v778 = vpop.permute.xlu0 %777
  %v780 = vsel %vm96, %v778, 0
  %782 = vmatpush.bf16.msra.mxu0 0
  %783 = vmatpush.bf16.msra.mxu0 0
  %784 = vmatpush.bf16.msra.mxu0 0
  %785 = vmatpush.bf16.msra.mxu0 0
  %786 = vmatpush.bf16.msra.mxu0 0
  %787 = vmatpush.bf16.msra.mxu0 0
  %788 = vmatpush.bf16.msra.mxu0 %v58
  %789 = vmatpush.bf16.msra.mxu0 %v57
  %790 = vmatmul.bf16.gmra.mxu0 %v780
  %v791 = vpop.f32.mrf.mxu0
  %v792 = vadd.f32 0.0, %v791
  %v793 = vpop.f32.mrf.mxu0
  %794 = vdwg.mxu0
  %v796 = vrot.slane %v792, 6
  %v798 = vadd.f32 %v88, %v796
  %v799 = vxor.u32 %v798, 2147483648
  %v800 = vmul.f32 %v799, 1.442695
  %v801 = vpow.pop %v800
  %v802 = vadd.f32 %v801, 1.0
  %v803 = vrcp.pop %v802
  %v804 = vmul.f32 %v802, %v803
  %v805 = vsub.f32 1.0, %v804
  %v806 = vmul.f32 %v803, %v805
  %v807 = vadd.f32 %v803, %v806
  %vm808 = vweird.f32 %v802
  %vm809 = vweird.f32 %v803
  %vm810 = vmor %vm808, %vm809
  %v811 = vsel %vm810, %v803, %v807
  %v812 = vand.u32 2147483647, %v802
  %vm813 = vcmp.eq.f32.partialorder %v812, 8.507059e+37
  %v814 = vand.u32 %v802, 2147483648
  %v815 = vor.u32 1.1754944e-38, %v814
  %v816 = vsel %vm813, %v815, %v811
  %v817 = vmul.f32 1.0, %v816
  %v818 = vtanh.pop %v798
  %v820 = vrot.slane %v768, 6
  %v822 = vmul.f32 %v817, %v820
  %824 = vrot.lane.b32.xlu0 %v818, 64
  %v825 = vpop.permute.xlu0 %824
  %v827 = vmul.f32 %v817, %v825
  %829 = vrot.lane.b32.xlu0 %v827, 32
  %v830 = vpop.permute.xlu0 %829
  %v832 = vadd.f32 %v822, %v830
  %v833 = vtanh.pop %v832
  %835 = vrot.lane.b32.xlu0 %v833, 64
  %v836 = vpop.permute.xlu0 %835
  %v838 = vmul.f32 %v817, %v836
  %v839 = vpack.c.bf16 %v838, %v838
  %v841 = vrot.slane %v839, 1
  %842 = vrot.lane.b32.xlu0 %v841, 32
  %v843 = vpop.permute.xlu0 %842
  %v845 = vsel %vm96, %v843, 0
  %847 = vmatpush.bf16.msra.mxu0 0
  %848 = vmatpush.bf16.msra.mxu0 0
  %849 = vmatpush.bf16.msra.mxu0 0
  %850 = vmatpush.bf16.msra.mxu0 0
  %851 = vmatpush.bf16.msra.mxu0 0
  %852 = vmatpush.bf16.msra.mxu0 0
  %853 = vmatpush.bf16.msra.mxu0 %v58
  %854 = vmatpush.bf16.msra.mxu0 %v57
  %855 = vmatmul.bf16.gmra.mxu0 %v845
  %v856 = vpop.f32.mrf.mxu0
  %v857 = vadd.f32 0.0, %v856
  %v858 = vpop.f32.mrf.mxu0
  %859 = vdwg.mxu0
  %v861 = vrot.slane %v857, 4
  %v863 = vadd.f32 %v88, %v861
  %v864 = vxor.u32 %v863, 2147483648
  %v865 = vmul.f32 %v864, 1.442695
  %v866 = vpow.pop %v865
  %v867 = vadd.f32 %v866, 1.0
  %v868 = vrcp.pop %v867
  %v869 = vmul.f32 %v867, %v868
  %v870 = vsub.f32 1.0, %v869
  %v871 = vmul.f32 %v868, %v870
  %v872 = vadd.f32 %v868, %v871
  %vm873 = vweird.f32 %v867
  %vm874 = vweird.f32 %v868
  %vm875 = vmor %vm873, %vm874
  %v876 = vsel %vm875, %v868, %v872
  %v877 = vand.u32 2147483647, %v867
  %vm878 = vcmp.eq.f32.partialorder %v877, 8.507059e+37
  %v879 = vand.u32 %v867, 2147483648
  %v880 = vor.u32 1.1754944e-38, %v879
  %v881 = vsel %vm878, %v880, %v876
  %v882 = vmul.f32 1.0, %v881
  %v883 = vtanh.pop %v863
  %v885 = vrot.slane %v832, 6
  %v887 = vmul.f32 %v882, %v885
  %889 = vrot.lane.b32.xlu0 %v883, 64
  %v890 = vpop.permute.xlu0 %889
  %v892 = vmul.f32 %v882, %v890
  %894 = vrot.lane.b32.xlu0 %v892, 32
  %v895 = vpop.permute.xlu0 %894
  %v897 = vadd.f32 %v887, %v895
  %v898 = vtanh.pop %v897
  %900 = vrot.lane.b32.xlu0 %v898, 64
  %v901 = vpop.permute.xlu0 %900
  %v903 = vmul.f32 %v882, %v901
  %v904 = vpack.c.bf16 %v903, %v903
  %v906 = vrot.slane %v904, 2
  %907 = vrot.lane.b32.xlu0 %v906, 32
  %v908 = vpop.permute.xlu0 %907
  %v910 = vsel %vm96, %v908, 0
  %912 = vmatpush.bf16.msra.mxu0 0
  %913 = vmatpush.bf16.msra.mxu0 0
  %914 = vmatpush.bf16.msra.mxu0 0
  %915 = vmatpush.bf16.msra.mxu0 0
  %916 = vmatpush.bf16.msra.mxu0 0
  %917 = vmatpush.bf16.msra.mxu0 0
  %918 = vmatpush.bf16.msra.mxu0 %v58
  %919 = vmatpush.bf16.msra.mxu0 %v57
  %920 = vmatmul.bf16.gmra.mxu0 %v910
  %v921 = vpop.f32.mrf.mxu0
  %v922 = vadd.f32 0.0, %v921
  %v923 = vpop.f32.mrf.mxu0
  %924 = vdwg.mxu0
  %v926 = vrot.slane %v922, 2
  %v928 = vadd.f32 %v88, %v926
  %v929 = vxor.u32 %v928, 2147483648
  %v930 = vmul.f32 %v929, 1.442695
  %v931 = vpow.pop %v930
  %v932 = vadd.f32 %v931, 1.0
  %v933 = vrcp.pop %v932
  %v934 = vmul.f32 %v932, %v933
  %v935 = vsub.f32 1.0, %v934
  %v936 = vmul.f32 %v933, %v935
  %v937 = vadd.f32 %v933, %v936
  %vm938 = vweird.f32 %v932
  %vm939 = vweird.f32 %v933
  %vm940 = vmor %vm938, %vm939
  %v941 = vsel %vm940, %v933, %v937
  %v942 = vand.u32 2147483647, %v932
  %vm943 = vcmp.eq.f32.partialorder %v942, 8.507059e+37
  %v944 = vand.u32 %v932, 2147483648
  %v945 = vor.u32 1.1754944e-38, %v944
  %v946 = vsel %vm943, %v945, %v941
  %v947 = vmul.f32 1.0, %v946
  %v948 = vtanh.pop %v928
  %v950 = vrot.slane %v897, 6
  %v952 = vmul.f32 %v947, %v950
  %954 = vrot.lane.b32.xlu0 %v948, 64
  %v955 = vpop.permute.xlu0 %954
  %v957 = vmul.f32 %v947, %v955
  %959 = vrot.lane.b32.xlu0 %v957, 32
  %v960 = vpop.permute.xlu0 %959
  %v962 = vadd.f32 %v952, %v960
  %v963 = vtanh.pop %v962
  %965 = vrot.lane.b32.xlu0 %v963, 64
  %v966 = vpop.permute.xlu0 %965
  %v968 = vmul.f32 %v947, %v966
  %v969 = vpack.c.bf16 %v968, %v968
  %v971 = vrot.slane %v969, 3
  %972 = vrot.lane.b32.xlu0 %v971, 32
  %v973 = vpop.permute.xlu0 %972
  %v975 = vsel %vm96, %v973, 0
  %977 = vmatpush.bf16.msra.mxu0 0
  %978 = vmatpush.bf16.msra.mxu0 0
  %979 = vmatpush.bf16.msra.mxu0 0
  %980 = vmatpush.bf16.msra.mxu0 0
  %981 = vmatpush.bf16.msra.mxu0 0
  %982 = vmatpush.bf16.msra.mxu0 0
  %983 = vmatpush.bf16.msra.mxu0 %v58
  %984 = vmatpush.bf16.msra.mxu0 %v57
  %985 = vmatmul.bf16.gmra.mxu0 %v975
  %v986 = vpop.f32.mrf.mxu0
  %v987 = vadd.f32 0.0, %v986
  %v988 = vpop.f32.mrf.mxu0
  %989 = vdwg.mxu0
  %v990 = vadd.f32 %v91, %v987
  %v991 = vxor.u32 %v990, 2147483648
  %v992 = vmul.f32 %v991, 1.442695
  %v993 = vpow.pop %v992
  %v994 = vadd.f32 %v993, 1.0
  %v995 = vrcp.pop %v994
  %v996 = vmul.f32 %v994, %v995
  %v997 = vsub.f32 1.0, %v996
  %v998 = vmul.f32 %v995, %v997
  %v999 = vadd.f32 %v995, %v998
  %vm1000 = vweird.f32 %v994
  %vm1001 = vweird.f32 %v995
  %vm1002 = vmor %vm1000, %vm1001
  %v1003 = vsel %vm1002, %v995, %v999
  %v1004 = vand.u32 2147483647, %v994
  %vm1005 = vcmp.eq.f32.partialorder %v1004, 8.507059e+37
  %v1006 = vand.u32 %v994, 2147483648
  %v1007 = vor.u32 1.1754944e-38, %v1006
  %v1008 = vsel %vm1005, %v1007, %v1003
  %v1009 = vmul.f32 1.0, %v1008
  %v1010 = vtanh.pop %v990
  %v1012 = vrot.slane %v962, 6
  %v1014 = vmul.f32 %v1009, %v1012
  %1016 = vrot.lane.b32.xlu0 %v1010, 64
  %v1017 = vpop.permute.xlu0 %1016
  %v1019 = vmul.f32 %v1009, %v1017
  %1021 = vrot.lane.b32.xlu0 %v1019, 32
  %v1022 = vpop.permute.xlu0 %1021
  %v1024 = vadd.f32 %v1014, %v1022
  %v1025 = vtanh.pop %v1024
  %1027 = vrot.lane.b32.xlu0 %v1025, 64
  %v1028 = vpop.permute.xlu0 %1027
  %v1030 = vmul.f32 %v1009, %v1028
  %v1031 = vpack.c.bf16 %v1030, %v1030
  %1033 = vrot.lane.b32.xlu0 %v1031, 32
  %v1034 = vpop.permute.xlu0 %1033
  %v1036 = vsel %vm96, %v1034, 0
  %1038 = vmatpush.bf16.msra.mxu0 0
  %1039 = vmatpush.bf16.msra.mxu0 0
  %1040 = vmatpush.bf16.msra.mxu0 0
  %1041 = vmatpush.bf16.msra.mxu0 0
  %1042 = vmatpush.bf16.msra.mxu0 0
  %1043 = vmatpush.bf16.msra.mxu0 0
  %1044 = vmatpush.bf16.msra.mxu0 %v58
  %1045 = vmatpush.bf16.msra.mxu0 %v57
  %1046 = vmatmul.bf16.gmra.mxu0 %v1036
  %v1047 = vpop.f32.mrf.mxu0
  %v1048 = vadd.f32 0.0, %v1047
  %v1049 = vpop.f32.mrf.mxu0
  %1050 = vdwg.mxu0
  %v1052 = vrot.slane %v1048, 6
  %v1054 = vadd.f32 %v91, %v1052
  %v1055 = vxor.u32 %v1054, 2147483648
  %v1056 = vmul.f32 %v1055, 1.442695
  %v1057 = vpow.pop %v1056
  %v1058 = vadd.f32 %v1057, 1.0
  %v1059 = vrcp.pop %v1058
  %v1060 = vmul.f32 %v1058, %v1059
  %v1061 = vsub.f32 1.0, %v1060
  %v1062 = vmul.f32 %v1059, %v1061
  %v1063 = vadd.f32 %v1059, %v1062
  %vm1064 = vweird.f32 %v1058
  %vm1065 = vweird.f32 %v1059
  %vm1066 = vmor %vm1064, %vm1065
  %v1067 = vsel %vm1066, %v1059, %v1063
  %v1068 = vand.u32 2147483647, %v1058
  %vm1069 = vcmp.eq.f32.partialorder %v1068, 8.507059e+37
  %v1070 = vand.u32 %v1058, 2147483648
  %v1071 = vor.u32 1.1754944e-38, %v1070
  %v1072 = vsel %vm1069, %v1071, %v1067
  %v1073 = vmul.f32 1.0, %v1072
  %v1074 = vtanh.pop %v1054
  %v1076 = vrot.slane %v1024, 6
  %v1078 = vmul.f32 %v1073, %v1076
  %1080 = vrot.lane.b32.xlu0 %v1074, 64
  %v1081 = vpop.permute.xlu0 %1080
  %v1083 = vmul.f32 %v1073, %v1081
  %1085 = vrot.lane.b32.xlu0 %v1083, 32
  %v1086 = vpop.permute.xlu0 %1085
  %v1088 = vadd.f32 %v1078, %v1086
  %v1089 = vtanh.pop %v1088
  %1091 = vrot.lane.b32.xlu0 %v1089, 64
  %v1092 = vpop.permute.xlu0 %1091
  %v1094 = vmul.f32 %v1073, %v1092
  %v1095 = vpack.c.bf16 %v1094, %v1094
  %v1097 = vrot.slane %v1095, 1
  %1098 = vrot.lane.b32.xlu0 %v1097, 32
  %v1099 = vpop.permute.xlu0 %1098
  %v1101 = vsel %vm96, %v1099, 0
  %1103 = vmatpush.bf16.msra.mxu0 0
  %1104 = vmatpush.bf16.msra.mxu0 0
  %1105 = vmatpush.bf16.msra.mxu0 0
  %1106 = vmatpush.bf16.msra.mxu0 0
  %1107 = vmatpush.bf16.msra.mxu0 0
  %1108 = vmatpush.bf16.msra.mxu0 0
  %1109 = vmatpush.bf16.msra.mxu0 %v58
  %1110 = vmatpush.bf16.msra.mxu0 %v57
  %1111 = vmatmul.bf16.gmra.mxu0 %v1101
  %v1112 = vpop.f32.mrf.mxu0
  %v1113 = vadd.f32 0.0, %v1112
  %v1114 = vpop.f32.mrf.mxu0
  %1115 = vdwg.mxu0
  %v1117 = vrot.slane %v1113, 4
  %v1119 = vadd.f32 %v91, %v1117
  %v1120 = vxor.u32 %v1119, 2147483648
  %v1121 = vmul.f32 %v1120, 1.442695
  %v1122 = vpow.pop %v1121
  %v1123 = vadd.f32 %v1122, 1.0
  %v1124 = vrcp.pop %v1123
  %v1125 = vmul.f32 %v1123, %v1124
  %v1126 = vsub.f32 1.0, %v1125
  %v1127 = vmul.f32 %v1124, %v1126
  %v1128 = vadd.f32 %v1124, %v1127
  %vm1129 = vweird.f32 %v1123
  %vm1130 = vweird.f32 %v1124
  %vm1131 = vmor %vm1129, %vm1130
  %v1132 = vsel %vm1131, %v1124, %v1128
  %v1133 = vand.u32 2147483647, %v1123
  %vm1134 = vcmp.eq.f32.partialorder %v1133, 8.507059e+37
  %v1135 = vand.u32 %v1123, 2147483648
  %v1136 = vor.u32 1.1754944e-38, %v1135
  %v1137 = vsel %vm1134, %v1136, %v1132
  %v1138 = vmul.f32 1.0, %v1137
  %v1139 = vtanh.pop %v1119
  %v1141 = vrot.slane %v1088, 6
  %v1143 = vmul.f32 %v1138, %v1141
  %1145 = vrot.lane.b32.xlu0 %v1139, 64
  %v1146 = vpop.permute.xlu0 %1145
  %v1148 = vmul.f32 %v1138, %v1146
  %1150 = vrot.lane.b32.xlu0 %v1148, 32
  %v1151 = vpop.permute.xlu0 %1150
  %v1153 = vadd.f32 %v1143, %v1151
  %v1154 = vtanh.pop %v1153
  %1156 = vrot.lane.b32.xlu0 %v1154, 64
  %v1157 = vpop.permute.xlu0 %1156
  %v1159 = vmul.f32 %v1138, %v1157
  %v1160 = vpack.c.bf16 %v1159, %v1159
  %v1162 = vrot.slane %v1160, 2
  %1163 = vrot.lane.b32.xlu0 %v1162, 32
  %v1164 = vpop.permute.xlu0 %1163
  %v1166 = vsel %vm96, %v1164, 0
  %1168 = vmatpush.bf16.msra.mxu0 0
  %1169 = vmatpush.bf16.msra.mxu0 0
  %1170 = vmatpush.bf16.msra.mxu0 0
  %1171 = vmatpush.bf16.msra.mxu0 0
  %1172 = vmatpush.bf16.msra.mxu0 0
  %1173 = vmatpush.bf16.msra.mxu0 0
  %1174 = vmatpush.bf16.msra.mxu0 %v58
  %1175 = vmatpush.bf16.msra.mxu0 %v57
  %1176 = vmatmul.bf16.gmra.mxu0 %v1166
  %v1177 = vpop.f32.mrf.mxu0
  %v1178 = vadd.f32 0.0, %v1177
  %v1179 = vpop.f32.mrf.mxu0
  %1180 = vdwg.mxu0
  %v1182 = vrot.slane %v1178, 2
  %v1184 = vadd.f32 %v91, %v1182
  %v1185 = vxor.u32 %v1184, 2147483648
  %v1186 = vmul.f32 %v1185, 1.442695
  %v1187 = vpow.pop %v1186
  %v1188 = vadd.f32 %v1187, 1.0
  %v1189 = vrcp.pop %v1188
  %v1190 = vmul.f32 %v1188, %v1189
  %v1191 = vsub.f32 1.0, %v1190
  %v1192 = vmul.f32 %v1189, %v1191
  %v1193 = vadd.f32 %v1189, %v1192
  %vm1194 = vweird.f32 %v1188
  %vm1195 = vweird.f32 %v1189
  %vm1196 = vmor %vm1194, %vm1195
  %v1197 = vsel %vm1196, %v1189, %v1193
  %v1198 = vand.u32 2147483647, %v1188
  %vm1199 = vcmp.eq.f32.partialorder %v1198, 8.507059e+37
  %v1200 = vand.u32 %v1188, 2147483648
  %v1201 = vor.u32 1.1754944e-38, %v1200
  %v1202 = vsel %vm1199, %v1201, %v1197
  %v1203 = vmul.f32 1.0, %v1202
  %v1204 = vtanh.pop %v1184
  %v1206 = vrot.slane %v1153, 6
  %v1208 = vmul.f32 %v1203, %v1206
  %1210 = vrot.lane.b32.xlu0 %v1204, 64
  %v1211 = vpop.permute.xlu0 %1210
  %v1213 = vmul.f32 %v1203, %v1211
  %1215 = vrot.lane.b32.xlu0 %v1213, 32
  %v1216 = vpop.permute.xlu0 %1215
  %v1218 = vadd.f32 %v1208, %v1216
  %v1219 = vtanh.pop %v1218
  %1221 = vrot.lane.b32.xlu0 %v1219, 64
  %v1222 = vpop.permute.xlu0 %1221
  %v1224 = vmul.f32 %v1203, %v1222
  %1226 = vrot.lane.b32.xlu0 %v774, 32
  %v1227 = vpop.permute.xlu0 %1226
  %v1230 = vrot.slane %v1224, 6
  %1231 = vrot.lane.b32.xlu0 %v1230, 32
  %v1232 = vpop.permute.xlu0 %1231
  %v1234 = vsel %vm95, %v1227, %v1232
  %v1236 = vrot.slane %v838, 2
  %1237 = vrot.lane.b32.xlu0 %v1236, 32
  %v1238 = vpop.permute.xlu0 %1237
  %v1241 = vrot.slane %v1159, 4
  %1242 = vrot.lane.b32.xlu0 %v1241, 32
  %v1243 = vpop.permute.xlu0 %1242
  %v1245 = vsel %vm95, %v1238, %v1243
  %v1247 = vrot.slane %v903, 4
  %1248 = vrot.lane.b32.xlu0 %v1247, 32
  %v1249 = vpop.permute.xlu0 %1248
  %v1252 = vrot.slane %v1094, 2
  %1253 = vrot.lane.b32.xlu0 %v1252, 32
  %v1254 = vpop.permute.xlu0 %1253
  %v1256 = vsel %vm95, %v1249, %v1254
  %v1258 = vrot.slane %v968, 6
  %1259 = vrot.lane.b32.xlu0 %v1258, 32
  %v1260 = vpop.permute.xlu0 %1259
  %1263 = vrot.lane.b32.xlu0 %v1030, 32
  %v1264 = vpop.permute.xlu0 %1263
  %v1266 = vsel %vm95, %v1260, %v1264
  %v1267 = vsel %vm95, %v1264, %v1260
  %v1268 = vsel %vm95, %v1254, %v1249
  %v1269 = vsel %vm95, %v1243, %v1238
  %v1270 = vsel %vm95, %v1232, %v1227
  %v1272 = vrot.slane %v1234, 1
  %v1275 = vrot.slane %v1245, 1
  %v1277 = vrot.slane %v1256, 1
  %v1279 = vrot.slane %v1266, 1
  %v1281 = vrot.slane %v1267, 1
  %v1283 = vrot.slane %v1268, 1
  %v1285 = vrot.slane %v1269, 1
  %v1287 = vrot.slane %v1270, 1
  %v1288 = vperm.slane %v1245, 0
  %v1289 = vperm.slane %v1275, 0
  %v1292 = vperm.slane %v1256, 0
  %v1293 = vperm.slane %v1277, 0
  %v1296 = vperm.slane %v1266, 0
  %v1297 = vperm.slane %v1279, 0
  %v1300 = vperm.slane %v1267, 0
  %v1301 = vperm.slane %v1281, 0
  %v1304 = vperm.slane %v1268, 0
  %v1305 = vperm.slane %v1283, 0
  %v1308 = vperm.slane %v1269, 0
  %v1309 = vperm.slane %v1285, 0
  %v1312 = vperm.slane %v1270, 0
  %v1313 = vperm.slane %v1287, 0
  %v1316 = vsel %vm692, %v1234, %v1288
  %v1317 = vsel %vm692, %v1272, %v1289
  %v1318 = vsel %vm695, %v1316, %v1292
  %v1319 = vsel %vm695, %v1317, %v1293
  %v1320 = vsel %vm698, %v1318, %v1296
  %v1321 = vsel %vm698, %v1319, %v1297
  %v1322 = vsel %vm701, %v1320, %v1300
  %v1323 = vsel %vm701, %v1321, %v1301
  %v1324 = vsel %vm704, %v1322, %v1304
  %v1325 = vsel %vm704, %v1323, %v1305
  %v1326 = vsel %vm707, %v1324, %v1308
  %v1327 = vsel %vm707, %v1325, %v1309
  %v1328 = vsel %vm710, %v1326, %v1312
  %v1329 = vsel %vm710, %v1327, %v1313
  %1330 = vrot.lane.b32.xlu0 %v646, 32
  %v1331 = vpop.permute.xlu0 %1330
  %v1333 = vsel %vm96, %v1270, %v1331
  %vm1334 = vcmask 523264
  %v1336 = vsel %vm1334, %v1333, 0
  %1338 = vmatpush.msra.mxu0 0.0
  %1339 = vmatpush.msra.mxu0 0.0
  %1340 = vmatpush.msra.mxu0 0.0
  %1341 = vmatpush.msra.mxu0 0.0
  %1342 = vmatpush.msra.mxu0 0.0
  %1343 = vmatpush.msra.mxu0 0.0
  %1344 = vmatpush.msra.mxu0 0.0
  %1345 = vmatpush.msra.mxu0 0.0
  %1346 = vmatpush.msra.mxu0 %v40
  %1347 = vmatpush.msra.mxu0 %v39
  %1348 = vmatpush.msra.mxu0 %v38
  %1349 = vmatpush.msra.mxu0 %v37
  %1350 = vmatpush.msra.mxu0 %v36
  %1351 = vmatpush.msra.mxu0 %v35
  %1352 = vmatpush.msra.mxu0 %v34
  %1353 = vmatpush.msra.mxu0 %v33
  %1354 = vmatmul.f32.gmra.mxu0 %v1336
  %v1355 = vpop.f32.mrf.mxu0
  %v1356 = vadd.f32 0.0, %v1355
  %1357 = vdwg.mxu0
  %v1359 = vrot.slane %v1356, 1
  %v1360 = vperm.slane %v1356, 0
  %v1361 = vperm.slane %v1359, 0
  %v1364 = vmul.f32 %v711, %v1360
  %v1365 = vmul.f32 %v712, %v1361
  %v1366 = vsel %vm96, %v1364, 0.0
  %1367 = vadd.xlane.f32.xlu0 %v1366
  %v1368 = vpop.xlane.xlu0 %1367
  %v1369 = vsel %vm96, %v1365, 0.0
  %1370 = vadd.xlane.f32.xlu0 %v1369
  %v1371 = vpop.xlane.xlu0 %1370
  %v1374 = vperm.slane %v1368, %v94
  %v1375 = vperm.slane %v1371, %v94
  %vm1376 = vcmask 1041409
  %v1377 = vsel %vm1376, %v1375, %v1374
  %vm1379 = vcmask 58368
  %v1380 = vsel %vm1379, %v1377, -inf
  %1381 = vmax.xlane.f32.xlu0 %v1380
  %v1382 = vpop.xlane.xlu0 %1381
  %v1384 = vperm.slane %v1382, 0
  %v1385 = vperm.slane %v1382, 1
  %v1388 = vsub.f32 %v1368, %v1384
  %v1389 = vsub.f32 %v1371, %v1385
  %v1390 = vmul.f32 %v1388, 1.442695
  %v1391 = vpow.pop %v1390
  %v1392 = vmul.f32 %v1389, 1.442695
  %v1393 = vpow.pop %v1392
  %1396 = vset.pattern.permute.xlu0 0
  %1397 = vperm.xlu0 %1396, %v1391
  %v1398 = vpop.permute.xlu0 %1397
  %1399 = vset.pattern.permute.xlu0 0
  %1400 = vperm.xlu0 %1399, %v1393
  %v1401 = vpop.permute.xlu0 %1400
  %v1402 = vperm.slane %v1398, %v94
  %v1403 = vperm.slane %v1401, %v94
  %v1404 = vsel %vm1376, %v1403, %v1402
  %v1406 = vsel %vm1379, %v1404, 0.0
  %1407 = vadd.xlane.f32.xlu0 %v1406
  %v1408 = vpop.xlane.xlu0 %1407
  %v1410 = vperm.slane %v1408, 0
  %v1411 = vperm.slane %v1408, 1
  %v1414 = vrcp.pop %v1410
  %v1415 = vmul.f32 %v1410, %v1414
  %v1416 = vsub.f32 1.0, %v1415
  %v1417 = vmul.f32 %v1414, %v1416
  %v1418 = vadd.f32 %v1414, %v1417
  %vm1419 = vweird.f32 %v1410
  %vm1420 = vweird.f32 %v1414
  %vm1421 = vmor %vm1419, %vm1420
  %v1422 = vsel %vm1421, %v1414, %v1418
  %v1423 = vand.u32 2147483647, %v1410
  %vm1424 = vcmp.eq.f32.partialorder %v1423, 8.507059e+37
  %v1425 = vand.u32 %v1410, 2147483648
  %v1426 = vor.u32 1.1754944e-38, %v1425
  %v1427 = vsel %vm1424, %v1426, %v1422
  %v1428 = vmul.f32 %v1391, %v1427
  %v1429 = vrcp.pop %v1411
  %v1430 = vmul.f32 %v1411, %v1429
  %v1431 = vsub.f32 1.0, %v1430
  %v1432 = vmul.f32 %v1429, %v1431
  %v1433 = vadd.f32 %v1429, %v1432
  %vm1434 = vweird.f32 %v1411
  %vm1435 = vweird.f32 %v1429
  %vm1436 = vmor %vm1434, %vm1435
  %v1437 = vsel %vm1436, %v1429, %v1433
  %v1438 = vand.u32 2147483647, %v1411
  %vm1439 = vcmp.eq.f32.partialorder %v1438, 8.507059e+37
  %v1440 = vand.u32 %v1411, 2147483648
  %v1441 = vor.u32 1.1754944e-38, %v1440
  %v1442 = vsel %vm1439, %v1441, %v1437
  %v1443 = vmul.f32 %v1393, %v1442
  %1445 = vset.pattern.permute.xlu0 0
  %1446 = vperm.xlu0 %1445, %v1428
  %v1447 = vpop.permute.xlu0 %1446
  %1450 = vset.pattern.permute.xlu0 0
  %1451 = vperm.xlu0 %1450, %v1443
  %v1452 = vpop.permute.xlu0 %1451
  %v1454 = vmul.f32 %v1447, %v711
  %v1455 = vmul.f32 %v1452, %v712
  %v1456 = vsel %vm96, %v1454, 0.0
  %v1457 = vrot.slane %v1456, 4
  %v1458 = vadd.f32 %v1456, %v1457
  %v1459 = vrot.slane %v1458, 2
  %v1460 = vadd.f32 %v1458, %v1459
  %v1461 = vrot.slane %v1460, 1
  %v1462 = vadd.f32 %v1460, %v1461
  %v1463 = vsel %vm96, %v1455, 0.0
  %v1464 = vrot.slane %v1463, 4
  %v1465 = vadd.f32 %v1463, %v1464
  %v1466 = vrot.slane %v1465, 2
  %v1467 = vadd.f32 %v1465, %v1466
  %v1468 = vrot.slane %v1467, 1
  %v1469 = vadd.f32 %v1467, %v1468
  %1470 = vrot.lane.b32.xlu0 %v1360, 96
  %v1471 = vpop.permute.xlu0 %1470
  %1472 = vrot.lane.b32.xlu0 %v1361, 96
  %v1473 = vpop.permute.xlu0 %1472
  %v1476 = vmul.f32 %v1328, %v1471
  %v1477 = vmul.f32 %v1329, %v1473
  %v1478 = vsel %vm96, %v1476, 0.0
  %1479 = vadd.xlane.f32.xlu0 %v1478
  %v1480 = vpop.xlane.xlu0 %1479
  %v1481 = vsel %vm96, %v1477, 0.0
  %1482 = vadd.xlane.f32.xlu0 %v1481
  %v1483 = vpop.xlane.xlu0 %1482
  %v1486 = vperm.slane %v1480, %v94
  %v1487 = vperm.slane %v1483, %v94
  %v1488 = vsel %vm1376, %v1487, %v1486
  %v1490 = vsel %vm1379, %v1488, -inf
  %1491 = vmax.xlane.f32.xlu0 %v1490
  %v1492 = vpop.xlane.xlu0 %1491
  %v1494 = vperm.slane %v1492, 0
  %v1495 = vperm.slane %v1492, 1
  %v1498 = vsub.f32 %v1480, %v1494
  %v1499 = vsub.f32 %v1483, %v1495
  %v1500 = vmul.f32 %v1498, 1.442695
  %v1501 = vpow.pop %v1500
  %v1502 = vmul.f32 %v1499, 1.442695
  %v1503 = vpow.pop %v1502
  %1506 = vset.pattern.permute.xlu0 0
  %1507 = vperm.xlu0 %1506, %v1501
  %v1508 = vpop.permute.xlu0 %1507
  %1509 = vset.pattern.permute.xlu0 0
  %1510 = vperm.xlu0 %1509, %v1503
  %v1511 = vpop.permute.xlu0 %1510
  %v1512 = vperm.slane %v1508, %v94
  %v1513 = vperm.slane %v1511, %v94
  %v1514 = vsel %vm1376, %v1513, %v1512
  %v1516 = vsel %vm1379, %v1514, 0.0
  %1517 = vadd.xlane.f32.xlu0 %v1516
  %v1518 = vpop.xlane.xlu0 %1517
  %v1520 = vperm.slane %v1518, 0
  %v1521 = vperm.slane %v1518, 1
  %v1524 = vrcp.pop %v1520
  %v1525 = vmul.f32 %v1520, %v1524
  %v1526 = vsub.f32 1.0, %v1525
  %v1527 = vmul.f32 %v1524, %v1526
  %v1528 = vadd.f32 %v1524, %v1527
  %vm1529 = vweird.f32 %v1520
  %vm1530 = vweird.f32 %v1524
  %vm1531 = vmor %vm1529, %vm1530
  %v1532 = vsel %vm1531, %v1524, %v1528
  %v1533 = vand.u32 2147483647, %v1520
  %vm1534 = vcmp.eq.f32.partialorder %v1533, 8.507059e+37
  %v1535 = vand.u32 %v1520, 2147483648
  %v1536 = vor.u32 1.1754944e-38, %v1535
  %v1537 = vsel %vm1534, %v1536, %v1532
  %v1538 = vmul.f32 %v1501, %v1537
  %v1539 = vrcp.pop %v1521
  %v1540 = vmul.f32 %v1521, %v1539
  %v1541 = vsub.f32 1.0, %v1540
  %v1542 = vmul.f32 %v1539, %v1541
  %v1543 = vadd.f32 %v1539, %v1542
  %vm1544 = vweird.f32 %v1521
  %vm1545 = vweird.f32 %v1539
  %vm1546 = vmor %vm1544, %vm1545
  %v1547 = vsel %vm1546, %v1539, %v1543
  %v1548 = vand.u32 2147483647, %v1521
  %vm1549 = vcmp.eq.f32.partialorder %v1548, 8.507059e+37
  %v1550 = vand.u32 %v1521, 2147483648
  %v1551 = vor.u32 1.1754944e-38, %v1550
  %v1552 = vsel %vm1549, %v1551, %v1547
  %v1553 = vmul.f32 %v1503, %v1552
  %1555 = vset.pattern.permute.xlu0 0
  %1556 = vperm.xlu0 %1555, %v1538
  %v1557 = vpop.permute.xlu0 %1556
  %1560 = vset.pattern.permute.xlu0 0
  %1561 = vperm.xlu0 %1560, %v1553
  %v1562 = vpop.permute.xlu0 %1561
  %v1564 = vmul.f32 %v1557, %v1328
  %v1565 = vmul.f32 %v1562, %v1329
  %v1566 = vsel %vm96, %v1564, 0.0
  %v1567 = vrot.slane %v1566, 4
  %v1568 = vadd.f32 %v1566, %v1567
  %v1569 = vrot.slane %v1568, 2
  %v1570 = vadd.f32 %v1568, %v1569
  %v1571 = vrot.slane %v1570, 1
  %v1572 = vadd.f32 %v1570, %v1571
  %v1573 = vsel %vm96, %v1565, 0.0
  %v1574 = vrot.slane %v1573, 4
  %v1575 = vadd.f32 %v1573, %v1574
  %v1576 = vrot.slane %v1575, 2
  %v1577 = vadd.f32 %v1575, %v1576
  %v1578 = vrot.slane %v1577, 1
  %v1579 = vadd.f32 %v1577, %v1578
  %v1582 = vsel %vm1376, %v1469, %v1462
  %1584 = vrot.lane.b32.xlu0 %v1270, 32
  %v1585 = vpop.permute.xlu0 %1584
  %v1589 = vsel %vm1376, %v1579, %v1572
  %1590 = vrot.lane.b32.xlu0 %v1589, 64
  %v1591 = vpop.permute.xlu0 %1590
  %1593 = vrot.lane.b32.xlu0 %v646, 96
  %v1594 = vpop.permute.xlu0 %1593
  %v1596 = vsel %vm96, %v1582, %v1585
  %v1597 = vsel %vm1334, %v1596, %v1591
  %vm1598 = vcmask 785408
  %v1599 = vsel %vm1598, %v1597, %v1594
  %1600 = vmatpush.msra.mxu0 %v56
  %1601 = vmatpush.msra.mxu0 %v55
  %1602 = vmatpush.msra.mxu0 %v54
  %1603 = vmatpush.msra.mxu0 %v53
  %1604 = vmatpush.msra.mxu0 %v52
  %1605 = vmatpush.msra.mxu0 %v51
  %1606 = vmatpush.msra.mxu0 %v50
  %1607 = vmatpush.msra.mxu0 %v49
  %1608 = vmatpush.msra.mxu0 %v48
  %1609 = vmatpush.msra.mxu0 %v47
  %1610 = vmatpush.msra.mxu0 %v46
  %1611 = vmatpush.msra.mxu0 %v45
  %1612 = vmatpush.msra.mxu0 %v44
  %1613 = vmatpush.msra.mxu0 %v43
  %1614 = vmatpush.msra.mxu0 %v42
  %1615 = vmatpush.msra.mxu0 %v41
  %1616 = vmatmul.f32.gmra.mxu0 %v1599
  %v1617 = vpop.f32.mrf.mxu0
  %v1618 = vadd.f32 0.0, %v1617
  %1619 = vdwg.mxu0
  %v1620 = vtanh.pop %v1618
  %1622 = vrot.lane.b32.xlu0 %v1620, 96
  %v1623 = vpop.permute.xlu0 %1622
  %v1625 = vsub.f32 %v1620, %v1623
  %v1626 = vadd.f32 %v1625, 1e-06
  %v1627 = vmul.f32 %v1626, %v1626
  %vm1628 = vcmask 254976
  %v1629 = vsel %vm1628, %v1627, 0.0
  %1630 = vadd.xlane.f32.xlu0 %v1629
  %v1631 = vpop.xlane.xlu0 %1630
  %v1632 = vrsqrt.pop %v1631
  %v1633 = vmul.f32 %v1632, %v1631
  %v1634 = vmul.f32 %v1633, %v1632
  %v1635 = vmul.f32 0.5, %v1634
  %v1636 = vsub.f32 1.5, %v1635
  %v1637 = vmul.f32 %v1632, %v1636
  %v1638 = vmul.f32 %v1631, %v1637
  %vm1639 = vcmp.eq.f32.partialorder %v1631, inf
  %v1640 = vsel %vm1639, %v1631, %v1638
  %vm1641 = vcmp.eq.f32.partialorder %v1631, 0.0
  %v1642 = vand.u32 %v1631, 2147483648
  %v1643 = vsel %vm1641, %v1642, %v1640
  %v1644 = vsel %vm96, %v646, %v1585
  %v1645 = vsel %vm1334, %v1644, %v1643
  %vm1646 = vcmask 531456
  %v1647 = vsel %vm1646, %v1645, 0.0
  %v1648 = vsel %vm695, %v1647, 0.0
  %1649 = vst [vmem:[%s2] sm:$0xff] %v1648
  // Predicated region
  $region10: #{siamese_forward.1} parent=0 // pred_check
    _
  $region11: #{siamese_forward.1} parent=0 // pred_check_branch
    %1651 = sbr.rel (0) target = $region13
  $region12: #{siamese_forward.1} parent=0 // pred_region
    _
  $region13: #{siamese_forward.1} parent=0 // pred_fallthru
    _
  // Predicated region
  $region14: #{siamese_forward.1} parent=0 // pred_check
    _
  $region15: #{siamese_forward.1} parent=0 // pred_check_branch
    %1653 = sbr.rel (0) target = $region17
  $region16: #{siamese_forward.1} parent=0 // pred_region
    _
  $region17: #{siamese_forward.1} parent=0 // pred_fallthru
    _

</llo_original>
